<compile_context>
chip_gen: v5e
topology: v5e:2x2
jax: 0.10.0
libtpu: 0.0.40
codegen_flags: <defaults>
</compile_context>

<pallas_src>
from functools import partial

import jax
import jax.numpy as jnp
import numpy as np
from jax.experimental import pallas as pl
from jax.experimental.pallas import tpu as pltpu


def _ru8(n):
    return ((n + 7) // 8) * 8


def _ru128(n):
    return ((n + 127) // 128) * 128


def _nonlocal_kernel(bt, C, IS, ISp, IC, NCD, offs,
                     x_ref, wproj_ref, misc_ref, out_ref):
    f32 = jnp.float32
    o_ggA, o_ggB, o_w1r, o_w1g, o_ww2 = offs
    rows = bt * C

    # Fused theta/phi/gx projection: one tall MXU matmul + one BN+ReLU pass.
    x_mm = x_ref[...].astype(wproj_ref.dtype)                  # bf16 by default
    proj = jnp.dot(x_mm, wproj_ref[...],
                   preferred_element_type=f32)                 # (rows, 3*ISp)
    proj = jnp.maximum(proj * misc_ref[0:1, 0:3 * ISp]
                       + misc_ref[1:2, 0:3 * ISp], 0.0)

    # 128-lane-aligned segment views (free; ISp is a multiple of 128).
    t_th = proj[:, 0:ISp]
    t_ph = proj[:, ISp:2 * ISp]
    t_gx = proj[:, 2 * ISp:3 * ISp]

    # Per-batch channel relation matrices without materialized XLU transposes:
    # Gc^T is simply the same batched contraction with operands swapped.
    th3 = t_th.reshape(bt, C, ISp)
    ph3 = t_ph.reshape(bt, C, ISp)
    gc = jnp.einsum('bci,bdi->bcd', th3, ph3,
                    preferred_element_type=f32).reshape(rows, C)
    gcT = jnp.einsum('bci,bdi->bcd', ph3, th3,
                     preferred_element_type=f32).reshape(rows, C)

    # Small weights / BN params, already transposed & split on the host.
    sgg = misc_ref[2:3, 0:IC]
    bgg = misc_ref[3:4, 0:IC]
    sw1 = misc_ref[4:5, 0:NCD]
    bw1 = misc_ref[5:6, 0:NCD]
    sw2 = misc_ref[6:7, 0:1]
    bw2 = misc_ref[7:8, 0:1]
    wggA = misc_ref[o_ggA:o_ggA + C, 0:IC]                     # (Wgg[:, :C]).T
    wggB = misc_ref[o_ggB:o_ggB + C, 0:IC]                     # (Wgg[:, C:]).T
    w1r = misc_ref[o_w1r:o_w1r + IC, 0:NCD]                    # (Ww1[:, 1:]).T
    w1g = misc_ref[o_w1g:o_w1g + 1, 0:NCD]                     # (Ww1[:, 0:1]).T
    ww2 = misc_ref[o_ww2:o_ww2 + 1, 0:NCD]                     # Ww2

    # gg_channel over cat(Gc_in, Gc_out): two full-height matmuls + BN + ReLU.
    gg = (jnp.dot(gc, wggA, preferred_element_type=f32)
          + jnp.dot(gcT, wggB, preferred_element_type=f32))    # (rows, IC)
    gg = jnp.maximum(gg * sgg + bgg, 0.0)

    # gx mean over the real inter-spatial width (zero pad lanes are harmless).
    gmean = jnp.sum(t_gx, axis=1, keepdims=True) * (1.0 / IS)  # (rows, 1)

    # W_channel: conv -> BN -> ReLU -> conv -> BN -> sigmoid gate.
    h1 = gmean * w1g + jnp.dot(gg, w1r, preferred_element_type=f32)
    h1 = jnp.maximum(h1 * sw1 + bw1, 0.0)                      # (rows, NCD)
    s = jnp.sum(h1 * ww2, axis=1, keepdims=True) * sw2 + bw2   # (rows, 1)
    gate = jax.nn.sigmoid(s)

    out_ref[...] = (gate * x_ref[...].astype(f32)).astype(out_ref.dtype)


def _pack_params(p, C, use_bf16_matmul):
    IS = p["Wth"].shape[0]
    IC = p["Wgg"].shape[0]
    NCD = p["Ww1"].shape[0]
    N = p["Wth"].shape[1]
    ISp = _ru128(IS)          # pad each theta/phi/gx segment to 128-lane multiple

    def pad_t(w):             # (IS, N) -> (N, ISp), transposed + zero-padded
        wt = np.zeros((N, ISp), np.float32)
        wt[:, :IS] = np.asarray(w, np.float32).T
        return wt

    wproj = np.concatenate([pad_t(p["Wth"]), pad_t(p["Wph"]), pad_t(p["Wgx"])],
                           axis=1)                              # (N, 3*ISp)
    wproj = jnp.asarray(wproj,
                        jnp.bfloat16 if use_bf16_matmul else jnp.float32)

    # One packed slab for everything else (small weights + BN scale/bias);
    # 8-row-aligned sub-blocks, 128-lane-aligned columns, kernel-ready layout.
    o_ggA = 8
    o_ggB = o_ggA + _ru8(C)
    o_w1r = o_ggB + _ru8(C)
    o_w1g = o_w1r + _ru8(IC)
    o_ww2 = o_w1g + 8
    rows = o_ww2 + 8
    width = _ru128(max(3 * ISp, IC, NCD))

    misc = np.zeros((rows, width), np.float32)

    def put(r, c, a):
        a = np.asarray(a, np.float32)
        if a.ndim == 1:
            a = a[None, :]
        misc[r:r + a.shape[0], c:c + a.shape[1]] = a

    # Projection BN scale/bias, each segment at a 128-lane-aligned offset;
    # pad lanes stay 0 so relu(0*0+0)=0 and downstream contractions ignore them.
    for seg, (sname, bname) in enumerate((("sth", "bth"), ("sph", "bph"),
                                          ("sgx", "bgx"))):
        put(0, seg * ISp, p[sname])
        put(1, seg * ISp, p[bname])
    put(2, 0, p["sgg"]); put(3, 0, p["bgg"])
    put(4, 0, p["sw1"]); put(5, 0, p["bw1"])
    put(6, 0, p["sw2"]); put(7, 0, p["bw2"])
    wgg = np.asarray(p["Wgg"], np.float32)
    ww1 = np.asarray(p["Ww1"], np.float32)
    put(o_ggA, 0, wgg[:, :C].T)
    put(o_ggB, 0, wgg[:, C:].T)
    put(o_w1r, 0, ww1[:, 1:].T)
    put(o_w1g, 0, ww1[:, 0:1].T)
    put(o_ww2, 0, p["Ww2"])
    return wproj, jnp.asarray(misc), ISp, (o_ggA, o_ggB, o_w1r, o_w1g, o_ww2)


def _device_kind():
    try:
        return jax.devices()[0].device_kind.lower()
    except Exception:  # pragma: no cover - defensive
        return ""


def _num_tensorcores(kind):
    # v7x exposes 2 TensorCores per chip to a Pallas grid (as do v4/v5p
    # megacore chips); v5e/v6e have a single TensorCore.
    if any(tag in kind for tag in ("v7", "7x", "v4", "v5p")):
        return 2
    return 1


def _pick_bt(B, C, num_tc, target_rows=256):
    """Batch elements per grid step: tall enough to fill MXU rows (>=256 on
    v6e/v7x, 128 already suffices on v5e), while keeping the step count
    divisible by the TensorCore count so megacore chips stay busy."""
    divs = [d for d in range(1, B + 1) if B % d == 0]
    cands = [d for d in divs if (B // d) % num_tc == 0] or divs
    for bt in cands:
        if bt * C >= target_rows:
            return bt
    return cands[-1]


def non_local_forward(x, p, *, use_bf16_matmul=True, single_buffer_weights=None):
    B, C, H, W = x.shape
    N = H * W
    IS = p["Wth"].shape[0]
    IC = p["Wgg"].shape[0]
    NCD = p["Ww1"].shape[0]
    if C % 8 or N % 128:
        raise NotImplementedError(
            "non_local_forward expects in_channel % 8 == 0 and H*W % 128 == 0;"
            " TODO(synk): host-side pad for general shapes")

    wproj, misc, ISp, offs = _pack_params(p, C, use_bf16_matmul)
    X = x.reshape(B * C, N)

    kind = _device_kind()
    num_tc = _num_tensorcores(kind)
    bt = _pick_bt(B, C, num_tc)
    grid_steps = B // bt

    if single_buffer_weights is None:
        # Single-buffering the grid-invariant slabs only matters on v7x
        # (64 MiB VMEM) at production in_spatial; keep default pipelining
        # elsewhere.
        single_buffer_weights = ("v7" in kind) or ("7x" in kind)

    cost = pl.CostEstimate(
        flops=2 * B * C * (N * 3 * ISp + 2 * C * ISp + 2 * C * IC
                           + IC * NCD + NCD),
        transcendentals=B * C,
        bytes_accessed=(2 * X.size * X.dtype.itemsize
                        + wproj.size * wproj.dtype.itemsize
                        + misc.size * misc.dtype.itemsize),
    )

    def call(weight_spec_kw):
        return pl.pallas_call(
            partial(_nonlocal_kernel, bt, C, IS, ISp, IC, NCD, offs),
            out_shape=jax.ShapeDtypeStruct((B * C, N), x.dtype),
            grid=(grid_steps,),
            in_specs=[
                pl.BlockSpec((bt * C, N), lambda i: (i, 0)),            # x block
                pl.BlockSpec(wproj.shape, lambda i: (0, 0),
                             **weight_spec_kw),                         # invariant
                pl.BlockSpec(misc.shape, lambda i: (0, 0),
                             **weight_spec_kw),                         # invariant
            ],
            out_specs=pl.BlockSpec((bt * C, N), lambda i: (i, 0)),
            compiler_params=pltpu.CompilerParams(
                dimension_semantics=("parallel",),
                vmem_limit_bytes=32 * 1024 * 1024),
            cost_estimate=cost,
        )(X, wproj, misc)

    if single_buffer_weights:
        try:
            out = jax.block_until_ready(
                call(dict(pipeline_mode=pl.Buffered(1))))
        except Exception:
            out = call({})    # fallback if this Pallas build rejects Buffered(1)
    else:
        out = call({})
    return out.reshape(B, C, H, W)


def make_params(key, in_channel, in_spatial, cha_ratio=4, spa_ratio=4,
                down_ratio=4):
    IS = in_spatial // spa_ratio
    IC = in_channel // cha_ratio
    NC = 1 + IC
    NCD = NC // down_ratio
    assert NCD >= 1, "need 1 + in_channel//cha_ratio >= down_ratio"
    eps = 1e-5
    ks = jax.random.split(key, 6)

    def bn(n, gscale, boff):
        gamma = gscale * jnp.ones((n,), jnp.float32) \
            + 0.01 * jnp.arange(n, dtype=jnp.float32)
        beta = boff * jnp.ones((n,), jnp.float32) \
            - 0.005 * jnp.arange(n, dtype=jnp.float32)
        # eval-mode BN with running_mean = 0, running_var = 1
        return gamma / jnp.sqrt(1.0 + eps), beta

    p = {}
    p["Wth"] = 0.1 * jax.random.normal(ks[0], (IS, in_spatial), jnp.float32)
    p["sth"], p["bth"] = bn(IS, 1.0, 0.0)
    p["Wph"] = 0.1 * jax.random.normal(ks[1], (IS, in_spatial), jnp.float32)
    p["sph"], p["bph"] = bn(IS, 0.9, 0.02)
    p["Wgx"] = 0.1 * jax.random.normal(ks[2], (IS, in_spatial), jnp.float32)
    p["sgx"], p["bgx"] = bn(IS, 1.1, -0.02)
    p["Wgg"] = 0.1 * jax.random.normal(ks[3], (IC, 2 * in_channel), jnp.float32)
    p["sgg"], p["bgg"] = bn(IC, 1.0, 0.01)
    p["Ww1"] = 0.1 * jax.random.normal(ks[4], (NCD, NC), jnp.float32)
    p["sw1"], p["bw1"] = bn(NCD, 1.0, 0.0)
    p["Ww2"] = 0.1 * jax.random.normal(ks[5], (1, NCD), jnp.float32)
    p["sw2"], p["bw2"] = bn(1, 1.0, 0.0)
    return p


def ref_forward(x, p):
    """Plain-JAX mirror of the PyTorch forward (eval-mode BN)."""
    b, c, h, w = x.shape
    xc = jnp.transpose(x.reshape(b, c, h * w), (0, 2, 1))[..., None]   # (b,N,c,1)

    def conv_bn_relu(inp, Wt, s, bias):
        y = jnp.einsum("oi,bihw->bohw", Wt, inp)
        y = y * s[None, :, None, None] + bias[None, :, None, None]
        return jnp.maximum(y, 0.0)

    theta = conv_bn_relu(xc, p["Wth"], p["sth"], p["bth"])[..., 0]     # (b,IS,c)
    theta = jnp.transpose(theta, (0, 2, 1))                            # (b,c,IS)
    phi = conv_bn_relu(xc, p["Wph"], p["sph"], p["bph"])[..., 0]       # (b,IS,c)
    Gc = jnp.matmul(theta, phi)                                        # (b,c,c)
    Gc_in = jnp.transpose(Gc, (0, 2, 1))[..., None]
    Gc_out = Gc[..., None]
    Gc_joint = jnp.concatenate((Gc_in, Gc_out), axis=1)                # (b,2c,c,1)
    Gc_joint = conv_bn_relu(Gc_joint, p["Wgg"], p["sgg"], p["bgg"])    # (b,IC,c,1)
    g_xc = conv_bn_relu(xc, p["Wgx"], p["sgx"], p["bgx"])              # (b,IS,c,1)
    g_xc = jnp.mean(g_xc, axis=1, keepdims=True)                       # (b,1,c,1)
    yc = jnp.concatenate((g_xc, Gc_joint), axis=1)                     # (b,NC,c,1)
    h1 = jnp.einsum("oi,bihw->bohw", p["Ww1"], yc)
    h1 = jnp.maximum(h1 * p["sw1"][None, :, None, None]
                     + p["bw1"][None, :, None, None], 0.0)
    W_yc = jnp.einsum("oi,bihw->bohw", p["Ww2"], h1)
    W_yc = W_yc * p["sw2"][None, :, None, None] \
        + p["bw2"][None, :, None, None]                                # (b,1,c,1)
    W_yc = jnp.transpose(W_yc, (0, 2, 1, 3))                           # (b,c,1,1)
    return jax.nn.sigmoid(W_yc) * x


if __name__ == "__main__":
    # in_channel=32, in_spatial=256 (H*W multiple of 128 -> lane-dense I/O)
    B, C, H, W = 2, 32, 16, 16
    key = jax.random.PRNGKey(0)
    kx, kp = jax.random.split(key)
    x = jax.random.normal(kx, (B, C, H, W), jnp.float32)
    params = make_params(kp, C, H * W)

    ref = ref_forward(x, params)

    # f32 MXU-operand path (tight check).
    out_f32 = jax.block_until_ready(
        non_local_forward(x, params, use_bf16_matmul=False))
    np.testing.assert_allclose(np.asarray(out_f32), np.asarray(ref),
                               rtol=2e-3, atol=2e-4)

    # Default path: bf16 MXU operands for the projection (all generations);
    # accumulation and element-wise math stay f32. Loose sanity check.
    out_bf16 = jax.block_until_ready(non_local_forward(x, params))
    np.testing.assert_allclose(np.asarray(out_bf16), np.asarray(ref),
                               rtol=5e-2, atol=5e-3)

    print("KERNEL_OK")
</pallas_src>

<mosaic_0001>
module attributes {stable_mosaic.version = 11 : i64} {
  func.func @_nonlocal_kernel(%arg0: i32, %arg1: memref<64x256xf32, #tpu.memory_space<vmem>>, %arg2: memref<256x384xf32, #tpu.memory_space<vmem>>, %arg3: memref<96x384xf32, #tpu.memory_space<vmem>>, %arg4: memref<64x256xf32, #tpu.memory_space<vmem>>) attributes {dimension_semantics = [#tpu.dimension_semantics<parallel>], iteration_bounds = array<i64: 1>, scalar_prefetch = 0 : i64, scratch_operands = 0 : i64, tpu.core_type = #tpu.core_type<tc>, window_params = [{transform_indices = @transform_0, window_bounds = array<i64: 64, 256>}, {pipeline_mode = #tpu.pipeline_mode<synchronous>, transform_indices = @transform_1, window_bounds = array<i64: 256, 384>}, {pipeline_mode = #tpu.pipeline_mode<synchronous>, transform_indices = @transform_2, window_bounds = array<i64: 96, 384>}, {transform_indices = @transform_3, window_bounds = array<i64: 64, 256>}]} {
    %c0 = arith.constant 0 : index
    %c0_0 = arith.constant 0 : index
    %0 = vector.load %arg1[%c0, %c0_0] : memref<64x256xf32, #tpu.memory_space<vmem>>, vector<64x256xf32>
    %c0_1 = arith.constant 0 : index
    %c0_2 = arith.constant 0 : index
    %1 = vector.load %arg2[%c0_1, %c0_2] : memref<256x384xf32, #tpu.memory_space<vmem>>, vector<256x384xf32>
    %cst = arith.constant dense<0.000000e+00> : vector<64x384xf32>
    %2 = tpu.matmul %0, %1, %cst {dimension_numbers = #tpu.dot_dimension_numbers<[1], [0], [0], [1], [0, 0, 1, 1], [], []>} : vector<64x256xf32>, vector<256x384xf32>, vector<64x384xf32> -> vector<64x384xf32>
    %c0_3 = arith.constant 0 : index
    %c0_4 = arith.constant 0 : index
    %3 = vector.load %arg3[%c0_3, %c0_4] : memref<96x384xf32, #tpu.memory_space<vmem>>, vector<1x384xf32>
    %4 = vector.broadcast %3 : vector<1x384xf32> to vector<64x384xf32>
    %5 = arith.mulf %2, %4 : vector<64x384xf32>
    %c1 = arith.constant 1 : index
    %c0_5 = arith.constant 0 : index
    %6 = vector.load %arg3[%c1, %c0_5] : memref<96x384xf32, #tpu.memory_space<vmem>>, vector<1x384xf32>
    %7 = vector.broadcast %6 : vector<1x384xf32> to vector<64x384xf32>
    %8 = arith.addf %5, %7 : vector<64x384xf32>
    %cst_6 = arith.constant 0.000000e+00 : f32
    %9 = vector.broadcast %cst_6 : f32 to vector<64x384xf32>
    %10 = arith.maximumf %8, %9 : vector<64x384xf32>
    %11 = vector.extract_strided_slice %10 {offsets = [0, 0], sizes = [64, 128], strides = [1, 1]} : vector<64x384xf32> to vector<64x128xf32>
    %12 = vector.extract_strided_slice %10 {offsets = [0, 128], sizes = [64, 128], strides = [1, 1]} : vector<64x384xf32> to vector<64x128xf32>
    %13 = vector.extract_strided_slice %10 {offsets = [0, 256], sizes = [64, 128], strides = [1, 1]} : vector<64x384xf32> to vector<64x128xf32>
    %14 = vector.shape_cast %11 : vector<64x128xf32> to vector<2x32x128xf32>
    %15 = vector.shape_cast %12 : vector<64x128xf32> to vector<2x32x128xf32>
    "tpu.trace_start"() <{level = 10 : i32, message = "bci,bdi->bcd"}> : () -> ()
    %cst_7 = arith.constant dense<0.000000e+00> : vector<2x32x32xf32>
    %16 = tpu.matmul %14, %15, %cst_7 {dimension_numbers = #tpu.dot_dimension_numbers<[2], [2], [1], [1], [0, 0, 0, 1, 1, 1], [0], [0]>} : vector<2x32x128xf32>, vector<2x32x128xf32>, vector<2x32x32xf32> -> vector<2x32x32xf32>
    "tpu.trace_stop"() : () -> ()
    %17 = vector.shape_cast %16 : vector<2x32x32xf32> to vector<64x32xf32>
    "tpu.trace_start"() <{level = 10 : i32, message = "bci,bdi->bcd"}> : () -> ()
    %cst_8 = arith.constant dense<0.000000e+00> : vector<2x32x32xf32>
    %18 = tpu.matmul %15, %14, %cst_8 {dimension_numbers = #tpu.dot_dimension_numbers<[2], [2], [1], [1], [0, 0, 0, 1, 1, 1], [0], [0]>} : vector<2x32x128xf32>, vector<2x32x128xf32>, vector<2x32x32xf32> -> vector<2x32x32xf32>
    "tpu.trace_stop"() : () -> ()
    %19 = vector.shape_cast %18 : vector<2x32x32xf32> to vector<64x32xf32>
    %c2 = arith.constant 2 : index
    %c0_9 = arith.constant 0 : index
    %20 = vector.load %arg3[%c2, %c0_9] : memref<96x384xf32, #tpu.memory_space<vmem>>, vector<1x8xf32>
    %c3 = arith.constant 3 : index
    %c0_10 = arith.constant 0 : index
    %21 = vector.load %arg3[%c3, %c0_10] : memref<96x384xf32, #tpu.memory_space<vmem>>, vector<1x8xf32>
    %c4 = arith.constant 4 : index
    %c0_11 = arith.constant 0 : index
    %22 = vector.load %arg3[%c4, %c0_11] : memref<96x384xf32, #tpu.memory_space<vmem>>, vector<1x2xf32>
    %c5 = arith.constant 5 : index
    %c0_12 = arith.constant 0 : index
    %23 = vector.load %arg3[%c5, %c0_12] : memref<96x384xf32, #tpu.memory_space<vmem>>, vector<1x2xf32>
    %c6 = arith.constant 6 : index
    %c0_13 = arith.constant 0 : index
    %24 = vector.load %arg3[%c6, %c0_13] : memref<96x384xf32, #tpu.memory_space<vmem>>, vector<1x1xf32>
    %c7 = arith.constant 7 : index
    %c0_14 = arith.constant 0 : index
    %25 = vector.load %arg3[%c7, %c0_14] : memref<96x384xf32, #tpu.memory_space<vmem>>, vector<1x1xf32>
    %c8 = arith.constant 8 : index
    %c0_15 = arith.constant 0 : index
    %26 = vector.load %arg3[%c8, %c0_15] : memref<96x384xf32, #tpu.memory_space<vmem>>, vector<32x8xf32>
    %c40 = arith.constant 40 : index
    %c0_16 = arith.constant 0 : index
    %27 = vector.load %arg3[%c40, %c0_16] : memref<96x384xf32, #tpu.memory_space<vmem>>, vector<32x8xf32>
    %c72 = arith.constant 72 : index
    %c0_17 = arith.constant 0 : index
    %28 = vector.load %arg3[%c72, %c0_17] : memref<96x384xf32, #tpu.memory_space<vmem>>, vector<8x2xf32>
    %c80 = arith.constant 80 : index
    %c0_18 = arith.constant 0 : index
    %29 = vector.load %arg3[%c80, %c0_18] : memref<96x384xf32, #tpu.memory_space<vmem>>, vector<1x2xf32>
    %c88 = arith.constant 88 : index
    %c0_19 = arith.constant 0 : index
    %30 = vector.load %arg3[%c88, %c0_19] : memref<96x384xf32, #tpu.memory_space<vmem>>, vector<1x2xf32>
    %cst_20 = arith.constant dense<0.000000e+00> : vector<64x8xf32>
    %31 = tpu.matmul %17, %26, %cst_20 {dimension_numbers = #tpu.dot_dimension_numbers<[1], [0], [0], [1], [0, 0, 1, 1], [], []>} : vector<64x32xf32>, vector<32x8xf32>, vector<64x8xf32> -> vector<64x8xf32>
    %cst_21 = arith.constant dense<0.000000e+00> : vector<64x8xf32>
    %32 = tpu.matmul %19, %27, %cst_21 {dimension_numbers = #tpu.dot_dimension_numbers<[1], [0], [0], [1], [0, 0, 1, 1], [], []>} : vector<64x32xf32>, vector<32x8xf32>, vector<64x8xf32> -> vector<64x8xf32>
    %33 = arith.addf %31, %32 : vector<64x8xf32>
    %34 = vector.broadcast %20 : vector<1x8xf32> to vector<64x8xf32>
    %35 = arith.mulf %33, %34 : vector<64x8xf32>
    %36 = vector.broadcast %21 : vector<1x8xf32> to vector<64x8xf32>
    %37 = arith.addf %35, %36 : vector<64x8xf32>
    %cst_22 = arith.constant 0.000000e+00 : f32
    %38 = vector.broadcast %cst_22 : f32 to vector<64x8xf32>
    %39 = arith.maximumf %37, %38 : vector<64x8xf32>
    %cst_23 = arith.constant dense<0.000000e+00> : vector<64xf32>
    %40 = vector.multi_reduction <add>, %13, %cst_23 [1] : vector<64x128xf32> to vector<64xf32>
    %41 = vector.shape_cast %40 : vector<64xf32> to vector<64x1xf32>
    %cst_24 = arith.constant 1.562500e-02 : f32
    %42 = vector.broadcast %cst_24 : f32 to vector<64x1xf32>
    %43 = arith.mulf %41, %42 : vector<64x1xf32>
    %44 = vector.broadcast %43 : vector<64x1xf32> to vector<64x2xf32>
    %45 = vector.broadcast %29 : vector<1x2xf32> to vector<64x2xf32>
    %46 = arith.mulf %44, %45 : vector<64x2xf32>
    %cst_25 = arith.constant dense<0.000000e+00> : vector<64x2xf32>
    %47 = tpu.matmul %39, %28, %cst_25 {dimension_numbers = #tpu.dot_dimension_numbers<[1], [0], [0], [1], [0, 0, 1, 1], [], []>} : vector<64x8xf32>, vector<8x2xf32>, vector<64x2xf32> -> vector<64x2xf32>
    %48 = arith.addf %46, %47 : vector<64x2xf32>
    %49 = vector.broadcast %22 : vector<1x2xf32> to vector<64x2xf32>
    %50 = arith.mulf %48, %49 : vector<64x2xf32>
    %51 = vector.broadcast %23 : vector<1x2xf32> to vector<64x2xf32>
    %52 = arith.addf %50, %51 : vector<64x2xf32>
    %cst_26 = arith.constant 0.000000e+00 : f32
    %53 = vector.broadcast %cst_26 : f32 to vector<64x2xf32>
    %54 = arith.maximumf %52, %53 : vector<64x2xf32>
    %55 = vector.broadcast %30 : vector<1x2xf32> to vector<64x2xf32>
    %56 = arith.mulf %54, %55 : vector<64x2xf32>
    %cst_27 = arith.constant dense<0.000000e+00> : vector<64xf32>
    %57 = vector.multi_reduction <add>, %56, %cst_27 [1] : vector<64x2xf32> to vector<64xf32>
    %58 = vector.shape_cast %57 : vector<64xf32> to vector<64x1xf32>
    %59 = vector.broadcast %24 : vector<1x1xf32> to vector<64x1xf32>
    %60 = arith.mulf %58, %59 : vector<64x1xf32>
    %61 = vector.broadcast %25 : vector<1x1xf32> to vector<64x1xf32>
    %62 = arith.addf %60, %61 : vector<64x1xf32>
    %63 = arith.negf %62 : vector<64x1xf32>
    %64 = math.exp %63 : vector<64x1xf32>
    %cst_28 = arith.constant 1.000000e+00 : f32
    %65 = vector.broadcast %cst_28 : f32 to vector<64x1xf32>
    %66 = arith.addf %65, %64 : vector<64x1xf32>
    %67 = arith.divf %65, %66 : vector<64x1xf32>
    %c0_29 = arith.constant 0 : index
    %c0_30 = arith.constant 0 : index
    %68 = vector.load %arg1[%c0_29, %c0_30] : memref<64x256xf32, #tpu.memory_space<vmem>>, vector<64x256xf32>
    %69 = vector.broadcast %67 : vector<64x1xf32> to vector<64x256xf32>
    %70 = arith.mulf %69, %68 : vector<64x256xf32>
    %c0_31 = arith.constant 0 : index
    %c0_32 = arith.constant 0 : index
    %71 = vector.load %arg4[%c0_31, %c0_32] : memref<64x256xf32, #tpu.memory_space<vmem>>, vector<64x256xf32>
    tpu.vector_store %arg4[%c0_31, %c0_32], %70 {strides = array<i32>} : memref<64x256xf32, #tpu.memory_space<vmem>>, vector<64x256xf32>,
    return
  }
  func.func @transform_0(%arg0: i32) -> (i32, i32) {
    %c0_i32 = arith.constant 0 : i32
    %c0_i32_0 = arith.constant 0 : i32
    return %arg0, %c0_i32 : i32, i32
  }
  func.func @transform_1(%arg0: i32) -> (i32, i32) {
    %c0_i32 = arith.constant 0 : i32
    %c0_i32_0 = arith.constant 0 : i32
    %c0_i32_1 = arith.constant 0 : i32
    return %c0_i32, %c0_i32_0 : i32, i32
  }
  func.func @transform_2(%arg0: i32) -> (i32, i32) {
    %c0_i32 = arith.constant 0 : i32
    %c0_i32_0 = arith.constant 0 : i32
    %c0_i32_1 = arith.constant 0 : i32
    return %c0_i32, %c0_i32_0 : i32, i32
  }
  func.func @transform_3(%arg0: i32) -> (i32, i32) {
    %c0_i32 = arith.constant 0 : i32
    %c0_i32_0 = arith.constant 0 : i32
    return %arg0, %c0_i32 : i32, i32
  }
}

</mosaic_0001>

<llo_original>
// kernel: tpu_custom_call.1
$region0: #{tpu_custom_call.1}
  #allocation0 [shape = 'u32[]', space=smem, size = 0x4, offset = 0x4, fixed_abs, tag = 'smem constant byte address 0x4 - core index']
  #allocation1 [shape = 'u32[72,128]{1,0:T(1,128)}', space=vmem, size = 0x9000, scoped, tag = 'internal scratch']
  %s0 = inlined_call_operand.hbm [shape: f32[64,256], index: 0, kind: input, shape index: {}]
  %s1 = inlined_call_operand.hbm [shape: f32[256,384], index: 1, kind: input, shape index: {}]
  %s2 = inlined_call_operand.hbm [shape: f32[96,384], index: 2, kind: input, shape index: {}]
  %s3 = inlined_call_operand.hbm [shape: f32[64,256], index: 3, kind: output, shape index: {}]
  %s4 = sld [smem:[#allocation0]]
  $region34: #{tpu_custom_call.1} parent=0
    _
  %s6 = ssub.s32 1, %s4
  %s7 = scalar_select 0, %s6, %s4
  $region1: #{tpu_custom_call.1} parent=0
    #allocation2 [shape = 'u8[65536]{0}', space=vmem, size = 0x10000, scoped, tag = 'input window, operand 0, single buffered']
    #allocation3 [shape = 's32[1]{0}', space=sflag, size = 0x4, scoped, tag = 'scoped memory for tpu_custom_call.1']
    #allocation4 [shape = 's32[1]{0}', space=sflag, size = 0x4, scoped, tag = 'scoped memory for tpu_custom_call.1']
    #allocation5 [shape = 'u8[393216]{0}', space=vmem, size = 0x60000, scoped, tag = 'input window, operand 1, single buffered']
    #allocation6 [shape = 's32[1]{0}', space=sflag, size = 0x4, scoped, tag = 'scoped memory for tpu_custom_call.1']
    #allocation7 [shape = 'u8[147456]{0}', space=vmem, size = 0x24000, scoped, tag = 'input window, operand 2, single buffered']
    #allocation8 [shape = 'u8[65536]{0}', space=vmem, size = 0x10000, scoped, tag = 'output window, operand 0, single buffered']
    %8 = vsyncpa [#allocation3], 0
    %9 = vsyncpa [#allocation6], 0
    %10 = vsyncpa [#allocation4], 0
    // Predicated region
    $region2: #{tpu_custom_call.1} parent=1 // pred_check
      _
    $region3: #{tpu_custom_call.1} parent=1 // pred_check_branch
      %12 = sbr.rel (0) target = $region5
    $region4: #{tpu_custom_call.1} parent=1 // pred_region
      %14 = vsyncadd [#allocation3], 0
      %s15 = sshll.u32 %s0, 4
      %s16 = int_to_ptr.hbm [resolvable:$true] %s15
      %s17 = sshll.u32 [#allocation2], 4
      %s18 = int_to_ptr.vmem [resolvable:$true] %s17
      %23 = dma.hbm_to_vmem [thread:$0]  %s16, 2048, %s18, [#allocation3], 256, 256, 16
    $region5: #{tpu_custom_call.1} parent=1 // pred_fallthru
      _
    // Predicated region
    $region6: #{tpu_custom_call.1} parent=1 // pred_check
      _
    $region7: #{tpu_custom_call.1} parent=1 // pred_check_branch
      %25 = sbr.rel (0) target = $region9
    $region8: #{tpu_custom_call.1} parent=1 // pred_region
      %27 = vsyncadd [#allocation6], 0
      %s28 = sshll.u32 %s1, 4
      %s29 = int_to_ptr.hbm [resolvable:$true] %s28
      %s30 = sshll.u32 [#allocation5], 4
      %s31 = int_to_ptr.vmem [resolvable:$true] %s30
      %36 = dma.hbm_to_vmem [thread:$0]  %s29, 12288, %s31, [#allocation6], 384, 384, 24
    $region9: #{tpu_custom_call.1} parent=1 // pred_fallthru
      _
    // Predicated region
    $region10: #{tpu_custom_call.1} parent=1 // pred_check
      _
    $region11: #{tpu_custom_call.1} parent=1 // pred_check_branch
      %38 = sbr.rel (0) target = $region13
    $region12: #{tpu_custom_call.1} parent=1 // pred_region
      %40 = vsyncadd [#allocation6], 0
      %s41 = sshll.u32 %s2, 4
      %s42 = int_to_ptr.hbm [resolvable:$true] %s41
      %s43 = sshll.u32 [#allocation7], 4
      %s44 = int_to_ptr.vmem [resolvable:$true] %s43
      %49 = dma.hbm_to_vmem [thread:$0]  %s42, 4608, %s44, [#allocation6], 384, 384, 24
    $region13: #{tpu_custom_call.1} parent=1 // pred_fallthru
      _
    // Predicated region
    $region14: #{tpu_custom_call.1} parent=1 // pred_check
      _
    $region15: #{tpu_custom_call.1} parent=1 // pred_check_branch
      %51 = sbr.rel (0) target = $region17
    $region16: #{tpu_custom_call.1} parent=1 // pred_region
      %53 = dma.done [#allocation3], 2048
    $region17: #{tpu_custom_call.1} parent=1 // pred_fallthru
      _
    // Predicated region
    $region18: #{tpu_custom_call.1} parent=1 // pred_check
      _
    $region19: #{tpu_custom_call.1} parent=1 // pred_check_branch
      %55 = sbr.rel (0) target = $region21
    $region20: #{tpu_custom_call.1} parent=1 // pred_region
      %57 = dma.done [#allocation6], 12288
    $region21: #{tpu_custom_call.1} parent=1 // pred_fallthru
      _
    // Predicated region
    $region22: #{tpu_custom_call.1} parent=1 // pred_check
      _
    $region23: #{tpu_custom_call.1} parent=1 // pred_check_branch
      %59 = sbr.rel (0) target = $region25
    $region24: #{tpu_custom_call.1} parent=1 // pred_region
      %61 = dma.done [#allocation6], 4608
    $region25: #{tpu_custom_call.1} parent=1 // pred_fallthru
      _
    %v62 = vld [vmem:[#allocation2] sm:$0xff]
    %v63 = vld [vmem:[#allocation2 + $0x8] sm:$0xff]
    %v64 = vld [vmem:[#allocation2 + $0x10] sm:$0xff]
    %v65 = vld [vmem:[#allocation2 + $0x18] sm:$0xff]
    %v66 = vld [vmem:[#allocation2 + $0x20] sm:$0xff]
    %v67 = vld [vmem:[#allocation2 + $0x28] sm:$0xff]
    %v68 = vld [vmem:[#allocation2 + $0x30] sm:$0xff]
    %v69 = vld [vmem:[#allocation2 + $0x38] sm:$0xff]
    %v70 = vld [vmem:[#allocation2 + $0x40] sm:$0xff]
    %v71 = vld [vmem:[#allocation2 + $0x48] sm:$0xff]
    %v72 = vld [vmem:[#allocation2 + $0x50] sm:$0xff]
    %v73 = vld [vmem:[#allocation2 + $0x58] sm:$0xff]
    %v74 = vld [vmem:[#allocation2 + $0x60] sm:$0xff]
    %v75 = vld [vmem:[#allocation2 + $0x68] sm:$0xff]
    %v76 = vld [vmem:[#allocation2 + $0x70] sm:$0xff]
    %v77 = vld [vmem:[#allocation2 + $0x78] sm:$0xff]
    %v78 = vld [vmem:[#allocation5] sm:$0xff]
    %v79 = vld [vmem:[#allocation5 + $0x8] sm:$0xff]
    %v80 = vld [vmem:[#allocation5 + $0x10] sm:$0xff]
    %v81 = vld [vmem:[#allocation5 + $0x18] sm:$0xff]
    %v82 = vld [vmem:[#allocation5 + $0x20] sm:$0xff]
    %v83 = vld [vmem:[#allocation5 + $0x28] sm:$0xff]
    %v84 = vld [vmem:[#allocation5 + $0x30] sm:$0xff]
    %v85 = vld [vmem:[#allocation5 + $0x38] sm:$0xff]
    %v86 = vld [vmem:[#allocation5 + $0x40] sm:$0xff]
    %v87 = vld [vmem:[#allocation5 + $0x48] sm:$0xff]
    %v88 = vld [vmem:[#allocation5 + $0x50] sm:$0xff]
    %v89 = vld [vmem:[#allocation5 + $0x58] sm:$0xff]
    %v90 = vld [vmem:[#allocation5 + $0x60] sm:$0xff]
    %v91 = vld [vmem:[#allocation5 + $0x68] sm:$0xff]
    %v92 = vld [vmem:[#allocation5 + $0x70] sm:$0xff]
    %v93 = vld [vmem:[#allocation5 + $0x78] sm:$0xff]
    %v94 = vld [vmem:[#allocation5 + $0x80] sm:$0xff]
    %v95 = vld [vmem:[#allocation5 + $0x88] sm:$0xff]
    %v96 = vld [vmem:[#allocation5 + $0x90] sm:$0xff]
    %v97 = vld [vmem:[#allocation5 + $0x98] sm:$0xff]
    %v98 = vld [vmem:[#allocation5 + $0xa0] sm:$0xff]
    %v99 = vld [vmem:[#allocation5 + $0xa8] sm:$0xff]
    %v100 = vld [vmem:[#allocation5 + $0xb0] sm:$0xff]
    %v101 = vld [vmem:[#allocation5 + $0xb8] sm:$0xff]
    %v102 = vld [vmem:[#allocation5 + $0xc0] sm:$0xff]
    %v103 = vld [vmem:[#allocation5 + $0xc8] sm:$0xff]
    %v104 = vld [vmem:[#allocation5 + $0xd0] sm:$0xff]
    %v105 = vld [vmem:[#allocation5 + $0xd8] sm:$0xff]
    %v106 = vld [vmem:[#allocation5 + $0xe0] sm:$0xff]
    %v107 = vld [vmem:[#allocation5 + $0xe8] sm:$0xff]
    %v108 = vld [vmem:[#allocation5 + $0xf0] sm:$0xff]
    %v109 = vld [vmem:[#allocation5 + $0xf8] sm:$0xff]
    %v110 = vld [vmem:[#allocation5 + $0x100] sm:$0xff]
    %v111 = vld [vmem:[#allocation5 + $0x108] sm:$0xff]
    %v112 = vld [vmem:[#allocation5 + $0x110] sm:$0xff]
    %v113 = vld [vmem:[#allocation5 + $0x118] sm:$0xff]
    %v114 = vld [vmem:[#allocation5 + $0x120] sm:$0xff]
    %v115 = vld [vmem:[#allocation5 + $0x128] sm:$0xff]
    %v116 = vld [vmem:[#allocation5 + $0x130] sm:$0xff]
    %v117 = vld [vmem:[#allocation5 + $0x138] sm:$0xff]
    %v118 = vld [vmem:[#allocation5 + $0x140] sm:$0xff]
    %v119 = vld [vmem:[#allocation5 + $0x148] sm:$0xff]
    %v120 = vld [vmem:[#allocation5 + $0x150] sm:$0xff]
    %v121 = vld [vmem:[#allocation5 + $0x158] sm:$0xff]
    %v122 = vld [vmem:[#allocation5 + $0x160] sm:$0xff]
    %v123 = vld [vmem:[#allocation5 + $0x168] sm:$0xff]
    %v124 = vld [vmem:[#allocation5 + $0x170] sm:$0xff]
    %v125 = vld [vmem:[#allocation5 + $0x178] sm:$0xff]
    %v126 = vld [vmem:[#allocation5 + $0x180] sm:$0xff]
    %v127 = vld [vmem:[#allocation5 + $0x188] sm:$0xff]
    %v128 = vld [vmem:[#allocation5 + $0x190] sm:$0xff]
    %v129 = vld [vmem:[#allocation5 + $0x198] sm:$0xff]
    %v130 = vld [vmem:[#allocation5 + $0x1a0] sm:$0xff]
    %v131 = vld [vmem:[#allocation5 + $0x1a8] sm:$0xff]
    %v132 = vld [vmem:[#allocation5 + $0x1b0] sm:$0xff]
    %v133 = vld [vmem:[#allocation5 + $0x1b8] sm:$0xff]
    %v134 = vld [vmem:[#allocation5 + $0x1c0] sm:$0xff]
    %v135 = vld [vmem:[#allocation5 + $0x1c8] sm:$0xff]
    %v136 = vld [vmem:[#allocation5 + $0x1d0] sm:$0xff]
    %v137 = vld [vmem:[#allocation5 + $0x1d8] sm:$0xff]
    %v138 = vld [vmem:[#allocation5 + $0x1e0] sm:$0xff]
    %v139 = vld [vmem:[#allocation5 + $0x1e8] sm:$0xff]
    %v140 = vld [vmem:[#allocation5 + $0x1f0] sm:$0xff]
    %v141 = vld [vmem:[#allocation5 + $0x1f8] sm:$0xff]
    %v142 = vld [vmem:[#allocation5 + $0x200] sm:$0xff]
    %v143 = vld [vmem:[#allocation5 + $0x208] sm:$0xff]
    %v144 = vld [vmem:[#allocation5 + $0x210] sm:$0xff]
    %v145 = vld [vmem:[#allocation5 + $0x218] sm:$0xff]
    %v146 = vld [vmem:[#allocation5 + $0x220] sm:$0xff]
    %v147 = vld [vmem:[#allocation5 + $0x228] sm:$0xff]
    %v148 = vld [vmem:[#allocation5 + $0x230] sm:$0xff]
    %v149 = vld [vmem:[#allocation5 + $0x238] sm:$0xff]
    %v150 = vld [vmem:[#allocation5 + $0x240] sm:$0xff]
    %v151 = vld [vmem:[#allocation5 + $0x248] sm:$0xff]
    %v152 = vld [vmem:[#allocation5 + $0x250] sm:$0xff]
    %v153 = vld [vmem:[#allocation5 + $0x258] sm:$0xff]
    %v154 = vld [vmem:[#allocation5 + $0x260] sm:$0xff]
    %v155 = vld [vmem:[#allocation5 + $0x268] sm:$0xff]
    %v156 = vld [vmem:[#allocation5 + $0x270] sm:$0xff]
    %v157 = vld [vmem:[#allocation5 + $0x278] sm:$0xff]
    %v158 = vld [vmem:[#allocation5 + $0x280] sm:$0xff]
    %v159 = vld [vmem:[#allocation5 + $0x288] sm:$0xff]
    %v160 = vld [vmem:[#allocation5 + $0x290] sm:$0xff]
    %v161 = vld [vmem:[#allocation5 + $0x298] sm:$0xff]
    %v162 = vld [vmem:[#allocation5 + $0x2a0] sm:$0xff]
    %v163 = vld [vmem:[#allocation5 + $0x2a8] sm:$0xff]
    %v164 = vld [vmem:[#allocation5 + $0x2b0] sm:$0xff]
    %v165 = vld [vmem:[#allocation5 + $0x2b8] sm:$0xff]
    %v166 = vld [vmem:[#allocation5 + $0x2c0] sm:$0xff]
    %v167 = vld [vmem:[#allocation5 + $0x2c8] sm:$0xff]
    %v168 = vld [vmem:[#allocation5 + $0x2d0] sm:$0xff]
    %v169 = vld [vmem:[#allocation5 + $0x2d8] sm:$0xff]
    %v170 = vld [vmem:[#allocation5 + $0x2e0] sm:$0xff]
    %v171 = vld [vmem:[#allocation5 + $0x2e8] sm:$0xff]
    %v172 = vld [vmem:[#allocation5 + $0x2f0] sm:$0xff]
    %v173 = vld [vmem:[#allocation5 + $0x2f8] sm:$0xff]
    %174 = vmatpush.msra.mxu0 %v123
    %175 = vmatpush.msra.mxu0 %v120
    %176 = vmatpush.msra.mxu0 %v117
    %177 = vmatpush.msra.mxu0 %v114
    %178 = vmatpush.msra.mxu0 %v111
    %179 = vmatpush.msra.mxu0 %v108
    %180 = vmatpush.msra.mxu0 %v105
    %181 = vmatpush.msra.mxu0 %v102
    %182 = vmatpush.msra.mxu0 %v99
    %183 = vmatpush.msra.mxu0 %v96
    %184 = vmatpush.msra.mxu0 %v93
    %185 = vmatpush.msra.mxu0 %v90
    %186 = vmatpush.msra.mxu0 %v87
    %187 = vmatpush.msra.mxu0 %v84
    %188 = vmatpush.msra.mxu0 %v81
    %189 = vmatpush.msra.mxu0 %v78
    %190 = vmatmul.f32.gmra.mxu0 %v62
    %v191 = vpop.f32.mrf.mxu0
    %v192 = vadd.f32 0.0, %v191
    %193 = vmatmul.f32.gmra.mxu0 %v64
    %v194 = vpop.f32.mrf.mxu0
    %v195 = vadd.f32 0.0, %v194
    %196 = vmatmul.f32.gmra.mxu0 %v66
    %v197 = vpop.f32.mrf.mxu0
    %v198 = vadd.f32 0.0, %v197
    %199 = vmatmul.f32.gmra.mxu0 %v68
    %v200 = vpop.f32.mrf.mxu0
    %v201 = vadd.f32 0.0, %v200
    %202 = vmatmul.f32.gmra.mxu0 %v70
    %v203 = vpop.f32.mrf.mxu0
    %v204 = vadd.f32 0.0, %v203
    %205 = vmatmul.f32.gmra.mxu0 %v72
    %v206 = vpop.f32.mrf.mxu0
    %v207 = vadd.f32 0.0, %v206
    %208 = vmatmul.f32.gmra.mxu0 %v74
    %v209 = vpop.f32.mrf.mxu0
    %v210 = vadd.f32 0.0, %v209
    %211 = vmatmul.f32.gmra.mxu0 %v76
    %v212 = vpop.f32.mrf.mxu0
    %v213 = vadd.f32 0.0, %v212
    %214 = vdwg.mxu0
    %215 = vmatpush.msra.mxu0 %v171
    %216 = vmatpush.msra.mxu0 %v168
    %217 = vmatpush.msra.mxu0 %v165
    %218 = vmatpush.msra.mxu0 %v162
    %219 = vmatpush.msra.mxu0 %v159
    %220 = vmatpush.msra.mxu0 %v156
    %221 = vmatpush.msra.mxu0 %v153
    %222 = vmatpush.msra.mxu0 %v150
    %223 = vmatpush.msra.mxu0 %v147
    %224 = vmatpush.msra.mxu0 %v144
    %225 = vmatpush.msra.mxu0 %v141
    %226 = vmatpush.msra.mxu0 %v138
    %227 = vmatpush.msra.mxu0 %v135
    %228 = vmatpush.msra.mxu0 %v132
    %229 = vmatpush.msra.mxu0 %v129
    %230 = vmatpush.msra.mxu0 %v126
    %231 = vmatmul.f32.gmra.mxu0 %v63
    %v232 = vpop.f32.mrf.mxu0
    %v233 = vadd.f32 %v192, %v232
    %234 = vmatmul.f32.gmra.mxu0 %v65
    %v235 = vpop.f32.mrf.mxu0
    %v236 = vadd.f32 %v195, %v235
    %237 = vmatmul.f32.gmra.mxu0 %v67
    %v238 = vpop.f32.mrf.mxu0
    %v239 = vadd.f32 %v198, %v238
    %240 = vmatmul.f32.gmra.mxu0 %v69
    %v241 = vpop.f32.mrf.mxu0
    %v242 = vadd.f32 %v201, %v241
    %243 = vmatmul.f32.gmra.mxu0 %v71
    %v244 = vpop.f32.mrf.mxu0
    %v245 = vadd.f32 %v204, %v244
    %246 = vmatmul.f32.gmra.mxu0 %v73
    %v247 = vpop.f32.mrf.mxu0
    %v248 = vadd.f32 %v207, %v247
    %249 = vmatmul.f32.gmra.mxu0 %v75
    %v250 = vpop.f32.mrf.mxu0
    %v251 = vadd.f32 %v210, %v250
    %252 = vmatmul.f32.gmra.mxu0 %v77
    %v253 = vpop.f32.mrf.mxu0
    %v254 = vadd.f32 %v213, %v253
    %255 = vdwg.mxu0
    %256 = vmatpush.msra.mxu0 %v124
    %257 = vmatpush.msra.mxu0 %v121
    %258 = vmatpush.msra.mxu0 %v118
    %259 = vmatpush.msra.mxu0 %v115
    %260 = vmatpush.msra.mxu0 %v112
    %261 = vmatpush.msra.mxu0 %v109
    %262 = vmatpush.msra.mxu0 %v106
    %263 = vmatpush.msra.mxu0 %v103
    %264 = vmatpush.msra.mxu0 %v100
    %265 = vmatpush.msra.mxu0 %v97
    %266 = vmatpush.msra.mxu0 %v94
    %267 = vmatpush.msra.mxu0 %v91
    %268 = vmatpush.msra.mxu0 %v88
    %269 = vmatpush.msra.mxu0 %v85
    %270 = vmatpush.msra.mxu0 %v82
    %271 = vmatpush.msra.mxu0 %v79
    %272 = vmatmul.f32.gmra.mxu0 %v62
    %v273 = vpop.f32.mrf.mxu0
    %v274 = vadd.f32 0.0, %v273
    %275 = vmatmul.f32.gmra.mxu0 %v64
    %v276 = vpop.f32.mrf.mxu0
    %v277 = vadd.f32 0.0, %v276
    %278 = vmatmul.f32.gmra.mxu0 %v66
    %v279 = vpop.f32.mrf.mxu0
    %v280 = vadd.f32 0.0, %v279
    %281 = vmatmul.f32.gmra.mxu0 %v68
    %v282 = vpop.f32.mrf.mxu0
    %v283 = vadd.f32 0.0, %v282
    %284 = vmatmul.f32.gmra.mxu0 %v70
    %v285 = vpop.f32.mrf.mxu0
    %v286 = vadd.f32 0.0, %v285
    %287 = vmatmul.f32.gmra.mxu0 %v72
    %v288 = vpop.f32.mrf.mxu0
    %v289 = vadd.f32 0.0, %v288
    %290 = vmatmul.f32.gmra.mxu0 %v74
    %v291 = vpop.f32.mrf.mxu0
    %v292 = vadd.f32 0.0, %v291
    %293 = vmatmul.f32.gmra.mxu0 %v76
    %v294 = vpop.f32.mrf.mxu0
    %v295 = vadd.f32 0.0, %v294
    %296 = vdwg.mxu0
    %297 = vmatpush.msra.mxu0 %v172
    %298 = vmatpush.msra.mxu0 %v169
    %299 = vmatpush.msra.mxu0 %v166
    %300 = vmatpush.msra.mxu0 %v163
    %301 = vmatpush.msra.mxu0 %v160
    %302 = vmatpush.msra.mxu0 %v157
    %303 = vmatpush.msra.mxu0 %v154
    %304 = vmatpush.msra.mxu0 %v151
    %305 = vmatpush.msra.mxu0 %v148
    %306 = vmatpush.msra.mxu0 %v145
    %307 = vmatpush.msra.mxu0 %v142
    %308 = vmatpush.msra.mxu0 %v139
    %309 = vmatpush.msra.mxu0 %v136
    %310 = vmatpush.msra.mxu0 %v133
    %311 = vmatpush.msra.mxu0 %v130
    %312 = vmatpush.msra.mxu0 %v127
    %313 = vmatmul.f32.gmra.mxu0 %v63
    %v314 = vpop.f32.mrf.mxu0
    %v315 = vadd.f32 %v274, %v314
    %316 = vmatmul.f32.gmra.mxu0 %v65
    %v317 = vpop.f32.mrf.mxu0
    %v318 = vadd.f32 %v277, %v317
    %319 = vmatmul.f32.gmra.mxu0 %v67
    %v320 = vpop.f32.mrf.mxu0
    %v321 = vadd.f32 %v280, %v320
    %322 = vmatmul.f32.gmra.mxu0 %v69
    %v323 = vpop.f32.mrf.mxu0
    %v324 = vadd.f32 %v283, %v323
    %325 = vmatmul.f32.gmra.mxu0 %v71
    %v326 = vpop.f32.mrf.mxu0
    %v327 = vadd.f32 %v286, %v326
    %328 = vmatmul.f32.gmra.mxu0 %v73
    %v329 = vpop.f32.mrf.mxu0
    %v330 = vadd.f32 %v289, %v329
    %331 = vmatmul.f32.gmra.mxu0 %v75
    %v332 = vpop.f32.mrf.mxu0
    %v333 = vadd.f32 %v292, %v332
    %334 = vmatmul.f32.gmra.mxu0 %v77
    %v335 = vpop.f32.mrf.mxu0
    %v336 = vadd.f32 %v295, %v335
    %337 = vdwg.mxu0
    %338 = vmatpush.msra.mxu0 %v125
    %339 = vmatpush.msra.mxu0 %v122
    %340 = vmatpush.msra.mxu0 %v119
    %341 = vmatpush.msra.mxu0 %v116
    %342 = vmatpush.msra.mxu0 %v113
    %343 = vmatpush.msra.mxu0 %v110
    %344 = vmatpush.msra.mxu0 %v107
    %345 = vmatpush.msra.mxu0 %v104
    %346 = vmatpush.msra.mxu0 %v101
    %347 = vmatpush.msra.mxu0 %v98
    %348 = vmatpush.msra.mxu0 %v95
    %349 = vmatpush.msra.mxu0 %v92
    %350 = vmatpush.msra.mxu0 %v89
    %351 = vmatpush.msra.mxu0 %v86
    %352 = vmatpush.msra.mxu0 %v83
    %353 = vmatpush.msra.mxu0 %v80
    %354 = vmatmul.f32.gmra.mxu0 %v62
    %v355 = vpop.f32.mrf.mxu0
    %v356 = vadd.f32 0.0, %v355
    %357 = vmatmul.f32.gmra.mxu0 %v64
    %v358 = vpop.f32.mrf.mxu0
    %v359 = vadd.f32 0.0, %v358
    %360 = vmatmul.f32.gmra.mxu0 %v66
    %v361 = vpop.f32.mrf.mxu0
    %v362 = vadd.f32 0.0, %v361
    %363 = vmatmul.f32.gmra.mxu0 %v68
    %v364 = vpop.f32.mrf.mxu0
    %v365 = vadd.f32 0.0, %v364
    %366 = vmatmul.f32.gmra.mxu0 %v70
    %v367 = vpop.f32.mrf.mxu0
    %v368 = vadd.f32 0.0, %v367
    %369 = vmatmul.f32.gmra.mxu0 %v72
    %v370 = vpop.f32.mrf.mxu0
    %v371 = vadd.f32 0.0, %v370
    %372 = vmatmul.f32.gmra.mxu0 %v74
    %v373 = vpop.f32.mrf.mxu0
    %v374 = vadd.f32 0.0, %v373
    %375 = vmatmul.f32.gmra.mxu0 %v76
    %v376 = vpop.f32.mrf.mxu0
    %v377 = vadd.f32 0.0, %v376
    %378 = vdwg.mxu0
    %379 = vmatpush.msra.mxu0 %v173
    %380 = vmatpush.msra.mxu0 %v170
    %381 = vmatpush.msra.mxu0 %v167
    %382 = vmatpush.msra.mxu0 %v164
    %383 = vmatpush.msra.mxu0 %v161
    %384 = vmatpush.msra.mxu0 %v158
    %385 = vmatpush.msra.mxu0 %v155
    %386 = vmatpush.msra.mxu0 %v152
    %387 = vmatpush.msra.mxu0 %v149
    %388 = vmatpush.msra.mxu0 %v146
    %389 = vmatpush.msra.mxu0 %v143
    %390 = vmatpush.msra.mxu0 %v140
    %391 = vmatpush.msra.mxu0 %v137
    %392 = vmatpush.msra.mxu0 %v134
    %393 = vmatpush.msra.mxu0 %v131
    %394 = vmatpush.msra.mxu0 %v128
    %395 = vmatmul.f32.gmra.mxu0 %v63
    %v396 = vpop.f32.mrf.mxu0
    %v397 = vadd.f32 %v356, %v396
    %398 = vmatmul.f32.gmra.mxu0 %v65
    %v399 = vpop.f32.mrf.mxu0
    %v400 = vadd.f32 %v359, %v399
    %401 = vmatmul.f32.gmra.mxu0 %v67
    %v402 = vpop.f32.mrf.mxu0
    %v403 = vadd.f32 %v362, %v402
    %404 = vmatmul.f32.gmra.mxu0 %v69
    %v405 = vpop.f32.mrf.mxu0
    %v406 = vadd.f32 %v365, %v405
    %407 = vmatmul.f32.gmra.mxu0 %v71
    %v408 = vpop.f32.mrf.mxu0
    %v409 = vadd.f32 %v368, %v408
    %410 = vmatmul.f32.gmra.mxu0 %v73
    %v411 = vpop.f32.mrf.mxu0
    %v412 = vadd.f32 %v371, %v411
    %413 = vmatmul.f32.gmra.mxu0 %v75
    %v414 = vpop.f32.mrf.mxu0
    %v415 = vadd.f32 %v374, %v414
    %416 = vmatmul.f32.gmra.mxu0 %v77
    %v417 = vpop.f32.mrf.mxu0
    %v418 = vadd.f32 %v377, %v417
    %419 = vdwg.mxu0
    %v420 = vld [vmem:[#allocation7] ss:$8 sm:$0x7]
    %v422 = vperm.slane %v420, 0
    %v423 = vperm.slane %v420, 1
    %v424 = vperm.slane %v420, 2
    %v428 = vmul.f32 %v233, %v422
    %v429 = vmul.f32 %v315, %v423
    %v430 = vmul.f32 %v397, %v424
    %v431 = vmul.f32 %v236, %v422
    %v432 = vmul.f32 %v318, %v423
    %v433 = vmul.f32 %v400, %v424
    %v434 = vmul.f32 %v239, %v422
    %v435 = vmul.f32 %v321, %v423
    %v436 = vmul.f32 %v403, %v424
    %v437 = vmul.f32 %v242, %v422
    %v438 = vmul.f32 %v324, %v423
    %v439 = vmul.f32 %v406, %v424
    %v440 = vmul.f32 %v245, %v422
    %v441 = vmul.f32 %v327, %v423
    %v442 = vmul.f32 %v409, %v424
    %v443 = vmul.f32 %v248, %v422
    %v444 = vmul.f32 %v330, %v423
    %v445 = vmul.f32 %v412, %v424
    %v446 = vmul.f32 %v251, %v422
    %v447 = vmul.f32 %v333, %v423
    %v448 = vmul.f32 %v415, %v424
    %v449 = vmul.f32 %v254, %v422
    %v450 = vmul.f32 %v336, %v423
    %v451 = vmul.f32 %v418, %v424
    %s452 = scalar_lea.vmem [#allocation7], 1
    %v453 = vld [vmem:[%s452] ss:$8 sm:$0x7]
    %v455 = vperm.slane %v453, 0
    %v456 = vperm.slane %v453, 1
    %v457 = vperm.slane %v453, 2
    %v461 = vadd.f32 %v428, %v455
    %v462 = vadd.f32 %v429, %v456
    %v463 = vadd.f32 %v430, %v457
    %v464 = vadd.f32 %v431, %v455
    %v465 = vadd.f32 %v432, %v456
    %v466 = vadd.f32 %v433, %v457
    %v467 = vadd.f32 %v434, %v455
    %v468 = vadd.f32 %v435, %v456
    %v469 = vadd.f32 %v436, %v457
    %v470 = vadd.f32 %v437, %v455
    %v471 = vadd.f32 %v438, %v456
    %v472 = vadd.f32 %v439, %v457
    %v473 = vadd.f32 %v440, %v455
    %v474 = vadd.f32 %v441, %v456
    %v475 = vadd.f32 %v442, %v457
    %v476 = vadd.f32 %v443, %v455
    %v477 = vadd.f32 %v444, %v456
    %v478 = vadd.f32 %v445, %v457
    %v479 = vadd.f32 %v446, %v455
    %v480 = vadd.f32 %v447, %v456
    %v481 = vadd.f32 %v448, %v457
    %v482 = vadd.f32 %v449, %v455
    %v483 = vadd.f32 %v450, %v456
    %v484 = vadd.f32 %v451, %v457
    %v485 = vmax.f32 %v461, 0.0
    %v486 = vmax.f32 %v462, 0.0
    %v487 = vmax.f32 %v463, 0.0
    %v488 = vmax.f32 %v464, 0.0
    %v489 = vmax.f32 %v465, 0.0
    %v490 = vmax.f32 %v466, 0.0
    %v491 = vmax.f32 %v467, 0.0
    %v492 = vmax.f32 %v468, 0.0
    %v493 = vmax.f32 %v469, 0.0
    %v494 = vmax.f32 %v470, 0.0
    %v495 = vmax.f32 %v471, 0.0
    %v496 = vmax.f32 %v472, 0.0
    %v497 = vmax.f32 %v473, 0.0
    %v498 = vmax.f32 %v474, 0.0
    %v499 = vmax.f32 %v475, 0.0
    %v500 = vmax.f32 %v476, 0.0
    %v501 = vmax.f32 %v477, 0.0
    %v502 = vmax.f32 %v478, 0.0
    %v503 = vmax.f32 %v479, 0.0
    %v504 = vmax.f32 %v480, 0.0
    %v505 = vmax.f32 %v481, 0.0
    %v506 = vmax.f32 %v482, 0.0
    %v507 = vmax.f32 %v483, 0.0
    %v508 = vmax.f32 %v484, 0.0
    %509 = vmatpush.xpose.msra.mxu0 0.0
    %510 = vmatpush.xpose.msra.mxu0 0.0
    %511 = vmatpush.xpose.msra.mxu0 0.0
    %512 = vmatpush.xpose.msra.mxu0 0.0
    %513 = vmatpush.xpose.msra.mxu0 0.0
    %514 = vmatpush.xpose.msra.mxu0 0.0
    %515 = vmatpush.xpose.msra.mxu0 0.0
    %516 = vmatpush.xpose.msra.mxu0 0.0
    %517 = vmatpush.xpose.msra.mxu0 0.0
    %518 = vmatpush.xpose.msra.mxu0 0.0
    %519 = vmatpush.xpose.msra.mxu0 0.0
    %520 = vmatpush.xpose.msra.mxu0 0.0
    %521 = vmatpush.xpose.msra.mxu0 %v495
    %522 = vmatpush.xpose.msra.mxu0 %v492
    %523 = vmatpush.xpose.msra.mxu0 %v489
    %524 = vmatpush.xpose.msra.mxu0 %v486
    %525 = vmatmul.f32.gmra.mxu0 %v485
    %v526 = vpop.f32.mrf.mxu0
    %v527 = vadd.f32 0.0, %v526
    %528 = vmatmul.f32.gmra.mxu0 %v488
    %v529 = vpop.f32.mrf.mxu0
    %v530 = vadd.f32 0.0, %v529
    %531 = vmatmul.f32.gmra.mxu0 %v491
    %v532 = vpop.f32.mrf.mxu0
    %v533 = vadd.f32 0.0, %v532
    %534 = vmatmul.f32.gmra.mxu0 %v494
    %v535 = vpop.f32.mrf.mxu0
    %v536 = vadd.f32 0.0, %v535
    %537 = vdwg.mxu0
    %538 = vmatpush.xpose.msra.mxu0 0.0
    %539 = vmatpush.xpose.msra.mxu0 0.0
    %540 = vmatpush.xpose.msra.mxu0 0.0
    %541 = vmatpush.xpose.msra.mxu0 0.0
    %542 = vmatpush.xpose.msra.mxu0 0.0
    %543 = vmatpush.xpose.msra.mxu0 0.0
    %544 = vmatpush.xpose.msra.mxu0 0.0
    %545 = vmatpush.xpose.msra.mxu0 0.0
    %546 = vmatpush.xpose.msra.mxu0 0.0
    %547 = vmatpush.xpose.msra.mxu0 0.0
    %548 = vmatpush.xpose.msra.mxu0 0.0
    %549 = vmatpush.xpose.msra.mxu0 0.0
    %550 = vmatpush.xpose.msra.mxu0 %v507
    %551 = vmatpush.xpose.msra.mxu0 %v504
    %552 = vmatpush.xpose.msra.mxu0 %v501
    %553 = vmatpush.xpose.msra.mxu0 %v498
    %554 = vmatmul.f32.gmra.mxu0 %v497
    %v555 = vpop.f32.mrf.mxu0
    %v556 = vadd.f32 0.0, %v555
    %557 = vmatmul.f32.gmra.mxu0 %v500
    %v558 = vpop.f32.mrf.mxu0
    %v559 = vadd.f32 0.0, %v558
    %560 = vmatmul.f32.gmra.mxu0 %v503
    %v561 = vpop.f32.mrf.mxu0
    %v562 = vadd.f32 0.0, %v561
    %563 = vmatmul.f32.gmra.mxu0 %v506
    %v564 = vpop.f32.mrf.mxu0
    %v565 = vadd.f32 0.0, %v564
    %566 = vdwg.mxu0
    %567 = vmatpush.xpose.msra.mxu0 0.0
    %568 = vmatpush.xpose.msra.mxu0 0.0
    %569 = vmatpush.xpose.msra.mxu0 0.0
    %570 = vmatpush.xpose.msra.mxu0 0.0
    %571 = vmatpush.xpose.msra.mxu0 0.0
    %572 = vmatpush.xpose.msra.mxu0 0.0
    %573 = vmatpush.xpose.msra.mxu0 0.0
    %574 = vmatpush.xpose.msra.mxu0 0.0
    %575 = vmatpush.xpose.msra.mxu0 0.0
    %576 = vmatpush.xpose.msra.mxu0 0.0
    %577 = vmatpush.xpose.msra.mxu0 0.0
    %578 = vmatpush.xpose.msra.mxu0 0.0
    %579 = vmatpush.xpose.msra.mxu0 %v494
    %580 = vmatpush.xpose.msra.mxu0 %v491
    %581 = vmatpush.xpose.msra.mxu0 %v488
    %582 = vmatpush.xpose.msra.mxu0 %v485
    %583 = vmatmul.f32.gmra.mxu0 %v486
    %v584 = vpop.f32.mrf.mxu0
    %v585 = vadd.f32 0.0, %v584
    %586 = vmatmul.f32.gmra.mxu0 %v489
    %v587 = vpop.f32.mrf.mxu0
    %v588 = vadd.f32 0.0, %v587
    %589 = vmatmul.f32.gmra.mxu0 %v492
    %v590 = vpop.f32.mrf.mxu0
    %v591 = vadd.f32 0.0, %v590
    %592 = vmatmul.f32.gmra.mxu0 %v495
    %v593 = vpop.f32.mrf.mxu0
    %v594 = vadd.f32 0.0, %v593
    %595 = vdwg.mxu0
    %596 = vmatpush.xpose.msra.mxu0 0.0
    %597 = vmatpush.xpose.msra.mxu0 0.0
    %598 = vmatpush.xpose.msra.mxu0 0.0
    %599 = vmatpush.xpose.msra.mxu0 0.0
    %600 = vmatpush.xpose.msra.mxu0 0.0
    %601 = vmatpush.xpose.msra.mxu0 0.0
    %602 = vmatpush.xpose.msra.mxu0 0.0
    %603 = vmatpush.xpose.msra.mxu0 0.0
    %604 = vmatpush.xpose.msra.mxu0 0.0
    %605 = vmatpush.xpose.msra.mxu0 0.0
    %606 = vmatpush.xpose.msra.mxu0 0.0
    %607 = vmatpush.xpose.msra.mxu0 0.0
    %608 = vmatpush.xpose.msra.mxu0 %v506
    %609 = vmatpush.xpose.msra.mxu0 %v503
    %610 = vmatpush.xpose.msra.mxu0 %v500
    %611 = vmatpush.xpose.msra.mxu0 %v497
    %612 = vmatmul.f32.gmra.mxu0 %v498
    %v613 = vpop.f32.mrf.mxu0
    %v614 = vadd.f32 0.0, %v613
    %615 = vmatmul.f32.gmra.mxu0 %v501
    %v616 = vpop.f32.mrf.mxu0
    %v617 = vadd.f32 0.0, %v616
    %618 = vmatmul.f32.gmra.mxu0 %v504
    %v619 = vpop.f32.mrf.mxu0
    %v620 = vadd.f32 0.0, %v619
    %621 = vmatmul.f32.gmra.mxu0 %v507
    %v622 = vpop.f32.mrf.mxu0
    %v623 = vadd.f32 0.0, %v622
    %624 = vdwg.mxu0
    %v625 = vld [vmem:[#allocation7 + $0x2] ss:$0 sm:$0xff]
    %v626 = vld [vmem:[#allocation7 + $0x3] ss:$0 sm:$0xff]
    %v627 = vld [vmem:[#allocation7 + $0x4] ss:$0 sm:$0xff]
    %v628 = vld [vmem:[#allocation7 + $0x5] ss:$0 sm:$0xff]
    %v629 = vld [vmem:[#allocation7 + $0x6] ss:$0 sm:$0xff]
    %v630 = vld [vmem:[#allocation7 + $0x7] ss:$0 sm:$0xff]
    %v631 = vld [vmem:[#allocation7 + $0x18] sm:$0xff]
    %v632 = vld [vmem:[#allocation7 + $0x30] sm:$0xff]
    %v633 = vld [vmem:[#allocation7 + $0x48] sm:$0xff]
    %v634 = vld [vmem:[#allocation7 + $0x60] sm:$0xff]
    %v635 = vld [vmem:[#allocation7 + $0x78] sm:$0xff]
    %v636 = vld [vmem:[#allocation7 + $0x90] sm:$0xff]
    %v637 = vld [vmem:[#allocation7 + $0xa8] sm:$0xff]
    %v638 = vld [vmem:[#allocation7 + $0xc0] sm:$0xff]
    %v639 = vld [vmem:[#allocation7 + $0xd8] sm:$0xff]
    %v640 = vld [vmem:[#allocation7 + $0xf0] ss:$0 sm:$0xff]
    %v641 = vld [vmem:[#allocation7 + $0x108] ss:$0 sm:$0xff]
    %vm642 = vcmask 261120
    %v644 = vsel %vm642, %v585, 0
    %v647 = vsel %vm642, %v588, 0
    %v650 = vsel %vm642, %v591, 0
    %v653 = vsel %vm642, %v594, 0
    %v656 = vsel %vm642, %v614, 0
    %v659 = vsel %vm642, %v617, 0
    %v662 = vsel %vm642, %v620, 0
    %v665 = vsel %vm642, %v623, 0
    %667 = vmatpush.msra.mxu0 0.0
    %668 = vmatpush.msra.mxu0 0.0
    %669 = vmatpush.msra.mxu0 0.0
    %670 = vmatpush.msra.mxu0 0.0
    %671 = vmatpush.msra.mxu0 0.0
    %672 = vmatpush.msra.mxu0 0.0
    %673 = vmatpush.msra.mxu0 0.0
    %674 = vmatpush.msra.mxu0 0.0
    %675 = vmatpush.msra.mxu0 0.0
    %676 = vmatpush.msra.mxu0 0.0
    %677 = vmatpush.msra.mxu0 0.0
    %678 = vmatpush.msra.mxu0 0.0
    %679 = vmatpush.msra.mxu0 %v638
    %680 = vmatpush.msra.mxu0 %v637
    %681 = vmatpush.msra.mxu0 %v636
    %682 = vmatpush.msra.mxu0 %v635
    %683 = vmatmul.f32.gmra.mxu0 %v644
    %v684 = vpop.f32.mrf.mxu0
    %v685 = vadd.f32 0.0, %v684
    %686 = vmatmul.f32.gmra.mxu0 %v647
    %v687 = vpop.f32.mrf.mxu0
    %v688 = vadd.f32 0.0, %v687
    %689 = vmatmul.f32.gmra.mxu0 %v650
    %v690 = vpop.f32.mrf.mxu0
    %v691 = vadd.f32 0.0, %v690
    %692 = vmatmul.f32.gmra.mxu0 %v653
    %v693 = vpop.f32.mrf.mxu0
    %v694 = vadd.f32 0.0, %v693
    %695 = vmatmul.f32.gmra.mxu0 %v656
    %v696 = vpop.f32.mrf.mxu0
    %v697 = vadd.f32 0.0, %v696
    %698 = vmatmul.f32.gmra.mxu0 %v659
    %v699 = vpop.f32.mrf.mxu0
    %v700 = vadd.f32 0.0, %v699
    %701 = vmatmul.f32.gmra.mxu0 %v662
    %v702 = vpop.f32.mrf.mxu0
    %v703 = vadd.f32 0.0, %v702
    %704 = vmatmul.f32.gmra.mxu0 %v665
    %v705 = vpop.f32.mrf.mxu0
    %v706 = vadd.f32 0.0, %v705
    %707 = vdwg.mxu0
    %v709 = vsel %vm642, %v527, 0
    %v712 = vsel %vm642, %v530, 0
    %v715 = vsel %vm642, %v533, 0
    %v718 = vsel %vm642, %v536, 0
    %v721 = vsel %vm642, %v556, 0
    %v724 = vsel %vm642, %v559, 0
    %v727 = vsel %vm642, %v562, 0
    %v730 = vsel %vm642, %v565, 0
    %732 = vmatpush.msra.mxu0 0.0
    %733 = vmatpush.msra.mxu0 0.0
    %734 = vmatpush.msra.mxu0 0.0
    %735 = vmatpush.msra.mxu0 0.0
    %736 = vmatpush.msra.mxu0 0.0
    %737 = vmatpush.msra.mxu0 0.0
    %738 = vmatpush.msra.mxu0 0.0
    %739 = vmatpush.msra.mxu0 0.0
    %740 = vmatpush.msra.mxu0 0.0
    %741 = vmatpush.msra.mxu0 0.0
    %742 = vmatpush.msra.mxu0 0.0
    %743 = vmatpush.msra.mxu0 0.0
    %744 = vmatpush.msra.mxu0 %v634
    %745 = vmatpush.msra.mxu0 %v633
    %746 = vmatpush.msra.mxu0 %v632
    %747 = vmatpush.msra.mxu0 %v631
    %748 = vmatmul.f32.gmra.mxu0 %v709
    %v749 = vpop.f32.mrf.mxu0
    %v750 = vadd.f32 %v685, %v749
    %751 = vmatmul.f32.gmra.mxu0 %v712
    %v752 = vpop.f32.mrf.mxu0
    %v753 = vadd.f32 %v688, %v752
    %754 = vmatmul.f32.gmra.mxu0 %v715
    %v755 = vpop.f32.mrf.mxu0
    %v756 = vadd.f32 %v691, %v755
    %757 = vmatmul.f32.gmra.mxu0 %v718
    %v758 = vpop.f32.mrf.mxu0
    %v759 = vadd.f32 %v694, %v758
    %760 = vmatmul.f32.gmra.mxu0 %v721
    %v761 = vpop.f32.mrf.mxu0
    %v762 = vadd.f32 %v697, %v761
    %763 = vmatmul.f32.gmra.mxu0 %v724
    %v764 = vpop.f32.mrf.mxu0
    %v765 = vadd.f32 %v700, %v764
    %766 = vmatmul.f32.gmra.mxu0 %v727
    %v767 = vpop.f32.mrf.mxu0
    %v768 = vadd.f32 %v703, %v767
    %769 = vmatmul.f32.gmra.mxu0 %v730
    %v770 = vpop.f32.mrf.mxu0
    %v771 = vadd.f32 %v706, %v770
    %772 = vdwg.mxu0
    %v773 = vmul.f32 %v750, %v625
    %v774 = vmul.f32 %v753, %v625
    %v775 = vmul.f32 %v756, %v625
    %v776 = vmul.f32 %v759, %v625
    %v777 = vmul.f32 %v762, %v625
    %v778 = vmul.f32 %v765, %v625
    %v779 = vmul.f32 %v768, %v625
    %v780 = vmul.f32 %v771, %v625
    %v781 = vadd.f32 %v773, %v626
    %v782 = vadd.f32 %v774, %v626
    %v783 = vadd.f32 %v775, %v626
    %v784 = vadd.f32 %v776, %v626
    %v785 = vadd.f32 %v777, %v626
    %v786 = vadd.f32 %v778, %v626
    %v787 = vadd.f32 %v779, %v626
    %v788 = vadd.f32 %v780, %v626
    %v789 = vmax.f32 %v781, 0.0
    %v790 = vmax.f32 %v782, 0.0
    %v791 = vmax.f32 %v783, 0.0
    %v792 = vmax.f32 %v784, 0.0
    %v793 = vmax.f32 %v785, 0.0
    %v794 = vmax.f32 %v786, 0.0
    %v795 = vmax.f32 %v787, 0.0
    %v796 = vmax.f32 %v788, 0.0
    %797 = vadd.xlane.f32.xlu0 %v487
    %v798 = vpop.xlane.xlu0 %797
    %799 = vadd.xlane.f32.xlu0 %v490
    %v800 = vpop.xlane.xlu0 %799
    %801 = vadd.xlane.f32.xlu0 %v493
    %v802 = vpop.xlane.xlu0 %801
    %803 = vadd.xlane.f32.xlu0 %v496
    %v804 = vpop.xlane.xlu0 %803
    %805 = vadd.xlane.f32.xlu0 %v499
    %v806 = vpop.xlane.xlu0 %805
    %807 = vadd.xlane.f32.xlu0 %v502
    %v808 = vpop.xlane.xlu0 %807
    %809 = vadd.xlane.f32.xlu0 %v505
    %v810 = vpop.xlane.xlu0 %809
    %811 = vadd.xlane.f32.xlu0 %v508
    %v812 = vpop.xlane.xlu0 %811
    %v813 = vmul.f32 %v798, 0.015625
    %v814 = vmul.f32 %v800, 0.015625
    %v815 = vmul.f32 %v802, 0.015625
    %v816 = vmul.f32 %v804, 0.015625
    %v817 = vmul.f32 %v806, 0.015625
    %v818 = vmul.f32 %v808, 0.015625
    %v819 = vmul.f32 %v810, 0.015625
    %v820 = vmul.f32 %v812, 0.015625
    %v821 = vmul.f32 %v813, %v640
    %v822 = vmul.f32 %v814, %v640
    %v823 = vmul.f32 %v815, %v640
    %v824 = vmul.f32 %v816, %v640
    %v825 = vmul.f32 %v817, %v640
    %v826 = vmul.f32 %v818, %v640
    %v827 = vmul.f32 %v819, %v640
    %v828 = vmul.f32 %v820, %v640
    %vm829 = vcmask 64512
    %v831 = vsel %vm829, %v789, 0
    %v834 = vsel %vm829, %v790, 0
    %v837 = vsel %vm829, %v791, 0
    %v840 = vsel %vm829, %v792, 0
    %v843 = vsel %vm829, %v793, 0
    %v846 = vsel %vm829, %v794, 0
    %v849 = vsel %vm829, %v795, 0
    %v852 = vsel %vm829, %v796, 0
    %854 = vmatpush.msra.mxu0 0.0
    %855 = vmatpush.msra.mxu0 0.0
    %856 = vmatpush.msra.mxu0 0.0
    %857 = vmatpush.msra.mxu0 0.0
    %858 = vmatpush.msra.mxu0 0.0
    %859 = vmatpush.msra.mxu0 0.0
    %860 = vmatpush.msra.mxu0 0.0
    %861 = vmatpush.msra.mxu0 0.0
    %862 = vmatpush.msra.mxu0 0.0
    %863 = vmatpush.msra.mxu0 0.0
    %864 = vmatpush.msra.mxu0 0.0
    %865 = vmatpush.msra.mxu0 0.0
    %866 = vmatpush.msra.mxu0 0.0
    %867 = vmatpush.msra.mxu0 0.0
    %868 = vmatpush.msra.mxu0 0.0
    %869 = vmatpush.msra.mxu0 %v639
    %870 = vmatmul.f32.gmra.mxu0 %v831
    %v871 = vpop.f32.mrf.mxu0
    %v872 = vadd.f32 0.0, %v871
    %873 = vmatmul.f32.gmra.mxu0 %v834
    %v874 = vpop.f32.mrf.mxu0
    %v875 = vadd.f32 0.0, %v874
    %876 = vmatmul.f32.gmra.mxu0 %v837
    %v877 = vpop.f32.mrf.mxu0
    %v878 = vadd.f32 0.0, %v877
    %879 = vmatmul.f32.gmra.mxu0 %v840
    %v880 = vpop.f32.mrf.mxu0
    %v881 = vadd.f32 0.0, %v880
    %882 = vmatmul.f32.gmra.mxu0 %v843
    %v883 = vpop.f32.mrf.mxu0
    %v884 = vadd.f32 0.0, %v883
    %885 = vmatmul.f32.gmra.mxu0 %v846
    %v886 = vpop.f32.mrf.mxu0
    %v887 = vadd.f32 0.0, %v886
    %888 = vmatmul.f32.gmra.mxu0 %v849
    %v889 = vpop.f32.mrf.mxu0
    %v890 = vadd.f32 0.0, %v889
    %891 = vmatmul.f32.gmra.mxu0 %v852
    %v892 = vpop.f32.mrf.mxu0
    %v893 = vadd.f32 0.0, %v892
    %894 = vdwg.mxu0
    %v895 = vadd.f32 %v821, %v872
    %v896 = vadd.f32 %v822, %v875
    %v897 = vadd.f32 %v823, %v878
    %v898 = vadd.f32 %v824, %v881
    %v899 = vadd.f32 %v825, %v884
    %v900 = vadd.f32 %v826, %v887
    %v901 = vadd.f32 %v827, %v890
    %v902 = vadd.f32 %v828, %v893
    %v903 = vmul.f32 %v895, %v627
    %v904 = vmul.f32 %v896, %v627
    %v905 = vmul.f32 %v897, %v627
    %v906 = vmul.f32 %v898, %v627
    %v907 = vmul.f32 %v899, %v627
    %v908 = vmul.f32 %v900, %v627
    %v909 = vmul.f32 %v901, %v627
    %v910 = vmul.f32 %v902, %v627
    %v911 = vadd.f32 %v903, %v628
    %v912 = vadd.f32 %v904, %v628
    %v913 = vadd.f32 %v905, %v628
    %v914 = vadd.f32 %v906, %v628
    %v915 = vadd.f32 %v907, %v628
    %v916 = vadd.f32 %v908, %v628
    %v917 = vadd.f32 %v909, %v628
    %v918 = vadd.f32 %v910, %v628
    %v919 = vmax.f32 %v911, 0.0
    %v920 = vmax.f32 %v912, 0.0
    %v921 = vmax.f32 %v913, 0.0
    %v922 = vmax.f32 %v914, 0.0
    %v923 = vmax.f32 %v915, 0.0
    %v924 = vmax.f32 %v916, 0.0
    %v925 = vmax.f32 %v917, 0.0
    %v926 = vmax.f32 %v918, 0.0
    %v927 = vmul.f32 %v919, %v641
    %v928 = vmul.f32 %v920, %v641
    %v929 = vmul.f32 %v921, %v641
    %v930 = vmul.f32 %v922, %v641
    %v931 = vmul.f32 %v923, %v641
    %v932 = vmul.f32 %v924, %v641
    %v933 = vmul.f32 %v925, %v641
    %v934 = vmul.f32 %v926, %v641
    %vm935 = vcmask 15360
    %v936 = vsel %vm935, %v927, 0.0
    %937 = vadd.xlane.f32.xlu0 %v936
    %v938 = vpop.xlane.xlu0 %937
    %v939 = vsel %vm935, %v928, 0.0
    %940 = vadd.xlane.f32.xlu0 %v939
    %v941 = vpop.xlane.xlu0 %940
    %v942 = vsel %vm935, %v929, 0.0
    %943 = vadd.xlane.f32.xlu0 %v942
    %v944 = vpop.xlane.xlu0 %943
    %v945 = vsel %vm935, %v930, 0.0
    %946 = vadd.xlane.f32.xlu0 %v945
    %v947 = vpop.xlane.xlu0 %946
    %v948 = vsel %vm935, %v931, 0.0
    %949 = vadd.xlane.f32.xlu0 %v948
    %v950 = vpop.xlane.xlu0 %949
    %v951 = vsel %vm935, %v932, 0.0
    %952 = vadd.xlane.f32.xlu0 %v951
    %v953 = vpop.xlane.xlu0 %952
    %v954 = vsel %vm935, %v933, 0.0
    %955 = vadd.xlane.f32.xlu0 %v954
    %v956 = vpop.xlane.xlu0 %955
    %v957 = vsel %vm935, %v934, 0.0
    %958 = vadd.xlane.f32.xlu0 %v957
    %v959 = vpop.xlane.xlu0 %958
    %v960 = vmul.f32 %v938, %v629
    %v961 = vmul.f32 %v941, %v629
    %v962 = vmul.f32 %v944, %v629
    %v963 = vmul.f32 %v947, %v629
    %v964 = vmul.f32 %v950, %v629
    %v965 = vmul.f32 %v953, %v629
    %v966 = vmul.f32 %v956, %v629
    %v967 = vmul.f32 %v959, %v629
    %v968 = vadd.f32 %v960, %v630
    %v969 = vadd.f32 %v961, %v630
    %v970 = vadd.f32 %v962, %v630
    %v971 = vadd.f32 %v963, %v630
    %v972 = vadd.f32 %v964, %v630
    %v973 = vadd.f32 %v965, %v630
    %v974 = vadd.f32 %v966, %v630
    %v975 = vadd.f32 %v967, %v630
    %v976 = vxor.u32 %v968, 2147483648
    %v977 = vxor.u32 %v969, 2147483648
    %v978 = vxor.u32 %v970, 2147483648
    %v979 = vxor.u32 %v971, 2147483648
    %v980 = vxor.u32 %v972, 2147483648
    %v981 = vxor.u32 %v973, 2147483648
    %v982 = vxor.u32 %v974, 2147483648
    %v983 = vxor.u32 %v975, 2147483648
    %v984 = vmul.f32 %v976, 1.442695
    %v985 = vpow.pop %v984
    %v986 = vmul.f32 %v977, 1.442695
    %v987 = vpow.pop %v986
    %v988 = vmul.f32 %v978, 1.442695
    %v989 = vpow.pop %v988
    %v990 = vmul.f32 %v979, 1.442695
    %v991 = vpow.pop %v990
    %v992 = vmul.f32 %v980, 1.442695
    %v993 = vpow.pop %v992
    %v994 = vmul.f32 %v981, 1.442695
    %v995 = vpow.pop %v994
    %v996 = vmul.f32 %v982, 1.442695
    %v997 = vpow.pop %v996
    %v998 = vmul.f32 %v983, 1.442695
    %v999 = vpow.pop %v998
    %v1000 = vadd.f32 %v985, 1.0
    %v1001 = vadd.f32 %v987, 1.0
    %v1002 = vadd.f32 %v989, 1.0
    %v1003 = vadd.f32 %v991, 1.0
    %v1004 = vadd.f32 %v993, 1.0
    %v1005 = vadd.f32 %v995, 1.0
    %v1006 = vadd.f32 %v997, 1.0
    %v1007 = vadd.f32 %v999, 1.0
    %v1008 = vrcp.pop %v1000
    %v1009 = vmul.f32 %v1000, %v1008
    %v1010 = vsub.f32 1.0, %v1009
    %v1011 = vmul.f32 %v1008, %v1010
    %v1012 = vadd.f32 %v1008, %v1011
    %vm1013 = vweird.f32 %v1000
    %vm1014 = vweird.f32 %v1008
    %vm1015 = vmor %vm1013, %vm1014
    %v1016 = vsel %vm1015, %v1008, %v1012
    %v1017 = vand.u32 2147483647, %v1000
    %vm1018 = vcmp.eq.f32.partialorder %v1017, 8.507059e+37
    %v1019 = vand.u32 %v1000, 2147483648
    %v1020 = vor.u32 1.1754944e-38, %v1019
    %v1021 = vsel %vm1018, %v1020, %v1016
    %v1022 = vmul.f32 1.0, %v1021
    %v1023 = vrcp.pop %v1001
    %v1024 = vmul.f32 %v1001, %v1023
    %v1025 = vsub.f32 1.0, %v1024
    %v1026 = vmul.f32 %v1023, %v1025
    %v1027 = vadd.f32 %v1023, %v1026
    %vm1028 = vweird.f32 %v1001
    %vm1029 = vweird.f32 %v1023
    %vm1030 = vmor %vm1028, %vm1029
    %v1031 = vsel %vm1030, %v1023, %v1027
    %v1032 = vand.u32 2147483647, %v1001
    %vm1033 = vcmp.eq.f32.partialorder %v1032, 8.507059e+37
    %v1034 = vand.u32 %v1001, 2147483648
    %v1035 = vor.u32 1.1754944e-38, %v1034
    %v1036 = vsel %vm1033, %v1035, %v1031
    %v1037 = vmul.f32 1.0, %v1036
    %v1038 = vrcp.pop %v1002
    %v1039 = vmul.f32 %v1002, %v1038
    %v1040 = vsub.f32 1.0, %v1039
    %v1041 = vmul.f32 %v1038, %v1040
    %v1042 = vadd.f32 %v1038, %v1041
    %vm1043 = vweird.f32 %v1002
    %vm1044 = vweird.f32 %v1038
    %vm1045 = vmor %vm1043, %vm1044
    %v1046 = vsel %vm1045, %v1038, %v1042
    %v1047 = vand.u32 2147483647, %v1002
    %vm1048 = vcmp.eq.f32.partialorder %v1047, 8.507059e+37
    %v1049 = vand.u32 %v1002, 2147483648
    %v1050 = vor.u32 1.1754944e-38, %v1049
    %v1051 = vsel %vm1048, %v1050, %v1046
    %v1052 = vmul.f32 1.0, %v1051
    %v1053 = vrcp.pop %v1003
    %v1054 = vmul.f32 %v1003, %v1053
    %v1055 = vsub.f32 1.0, %v1054
    %v1056 = vmul.f32 %v1053, %v1055
    %v1057 = vadd.f32 %v1053, %v1056
    %vm1058 = vweird.f32 %v1003
    %vm1059 = vweird.f32 %v1053
    %vm1060 = vmor %vm1058, %vm1059
    %v1061 = vsel %vm1060, %v1053, %v1057
    %v1062 = vand.u32 2147483647, %v1003
    %vm1063 = vcmp.eq.f32.partialorder %v1062, 8.507059e+37
    %v1064 = vand.u32 %v1003, 2147483648
    %v1065 = vor.u32 1.1754944e-38, %v1064
    %v1066 = vsel %vm1063, %v1065, %v1061
    %v1067 = vmul.f32 1.0, %v1066
    %v1068 = vrcp.pop %v1004
    %v1069 = vmul.f32 %v1004, %v1068
    %v1070 = vsub.f32 1.0, %v1069
    %v1071 = vmul.f32 %v1068, %v1070
    %v1072 = vadd.f32 %v1068, %v1071
    %vm1073 = vweird.f32 %v1004
    %vm1074 = vweird.f32 %v1068
    %vm1075 = vmor %vm1073, %vm1074
    %v1076 = vsel %vm1075, %v1068, %v1072
    %v1077 = vand.u32 2147483647, %v1004
    %vm1078 = vcmp.eq.f32.partialorder %v1077, 8.507059e+37
    %v1079 = vand.u32 %v1004, 2147483648
    %v1080 = vor.u32 1.1754944e-38, %v1079
    %v1081 = vsel %vm1078, %v1080, %v1076
    %v1082 = vmul.f32 1.0, %v1081
    %v1083 = vrcp.pop %v1005
    %v1084 = vmul.f32 %v1005, %v1083
    %v1085 = vsub.f32 1.0, %v1084
    %v1086 = vmul.f32 %v1083, %v1085
    %v1087 = vadd.f32 %v1083, %v1086
    %vm1088 = vweird.f32 %v1005
    %vm1089 = vweird.f32 %v1083
    %vm1090 = vmor %vm1088, %vm1089
    %v1091 = vsel %vm1090, %v1083, %v1087
    %v1092 = vand.u32 2147483647, %v1005
    %vm1093 = vcmp.eq.f32.partialorder %v1092, 8.507059e+37
    %v1094 = vand.u32 %v1005, 2147483648
    %v1095 = vor.u32 1.1754944e-38, %v1094
    %v1096 = vsel %vm1093, %v1095, %v1091
    %v1097 = vmul.f32 1.0, %v1096
    %v1098 = vrcp.pop %v1006
    %v1099 = vmul.f32 %v1006, %v1098
    %v1100 = vsub.f32 1.0, %v1099
    %v1101 = vmul.f32 %v1098, %v1100
    %v1102 = vadd.f32 %v1098, %v1101
    %vm1103 = vweird.f32 %v1006
    %vm1104 = vweird.f32 %v1098
    %vm1105 = vmor %vm1103, %vm1104
    %v1106 = vsel %vm1105, %v1098, %v1102
    %v1107 = vand.u32 2147483647, %v1006
    %vm1108 = vcmp.eq.f32.partialorder %v1107, 8.507059e+37
    %v1109 = vand.u32 %v1006, 2147483648
    %v1110 = vor.u32 1.1754944e-38, %v1109
    %v1111 = vsel %vm1108, %v1110, %v1106
    %v1112 = vmul.f32 1.0, %v1111
    %v1113 = vrcp.pop %v1007
    %v1114 = vmul.f32 %v1007, %v1113
    %v1115 = vsub.f32 1.0, %v1114
    %v1116 = vmul.f32 %v1113, %v1115
    %v1117 = vadd.f32 %v1113, %v1116
    %vm1118 = vweird.f32 %v1007
    %vm1119 = vweird.f32 %v1113
    %vm1120 = vmor %vm1118, %vm1119
    %v1121 = vsel %vm1120, %v1113, %v1117
    %v1122 = vand.u32 2147483647, %v1007
    %vm1123 = vcmp.eq.f32.partialorder %v1122, 8.507059e+37
    %v1124 = vand.u32 %v1007, 2147483648
    %v1125 = vor.u32 1.1754944e-38, %v1124
    %v1126 = vsel %vm1123, %v1125, %v1121
    %v1127 = vmul.f32 1.0, %v1126
    %v1128 = vld [vmem:[#allocation2] sm:$0xff]
    %v1129 = vld [vmem:[#allocation2 + $0x8] sm:$0xff]
    %v1130 = vld [vmem:[#allocation2 + $0x10] sm:$0xff]
    %v1131 = vld [vmem:[#allocation2 + $0x18] sm:$0xff]
    %v1132 = vld [vmem:[#allocation2 + $0x20] sm:$0xff]
    %v1133 = vld [vmem:[#allocation2 + $0x28] sm:$0xff]
    %v1134 = vld [vmem:[#allocation2 + $0x30] sm:$0xff]
    %v1135 = vld [vmem:[#allocation2 + $0x38] sm:$0xff]
    %v1136 = vld [vmem:[#allocation2 + $0x40] sm:$0xff]
    %v1137 = vld [vmem:[#allocation2 + $0x48] sm:$0xff]
    %v1138 = vld [vmem:[#allocation2 + $0x50] sm:$0xff]
    %v1139 = vld [vmem:[#allocation2 + $0x58] sm:$0xff]
    %v1140 = vld [vmem:[#allocation2 + $0x60] sm:$0xff]
    %v1141 = vld [vmem:[#allocation2 + $0x68] sm:$0xff]
    %v1142 = vld [vmem:[#allocation2 + $0x70] sm:$0xff]
    %v1143 = vld [vmem:[#allocation2 + $0x78] sm:$0xff]
    %1145 = vset.pattern.permute.xlu0 0
    %1146 = vperm.xlu0 %1145, %v1022
    %v1147 = vpop.permute.xlu0 %1146
    %1150 = vset.pattern.permute.xlu0 0
    %1151 = vperm.xlu0 %1150, %v1037
    %v1152 = vpop.permute.xlu0 %1151
    %1155 = vset.pattern.permute.xlu0 0
    %1156 = vperm.xlu0 %1155, %v1052
    %v1157 = vpop.permute.xlu0 %1156
    %1160 = vset.pattern.permute.xlu0 0
    %1161 = vperm.xlu0 %1160, %v1067
    %v1162 = vpop.permute.xlu0 %1161
    %1165 = vset.pattern.permute.xlu0 0
    %1166 = vperm.xlu0 %1165, %v1082
    %v1167 = vpop.permute.xlu0 %1166
    %1170 = vset.pattern.permute.xlu0 0
    %1171 = vperm.xlu0 %1170, %v1097
    %v1172 = vpop.permute.xlu0 %1171
    %1175 = vset.pattern.permute.xlu0 0
    %1176 = vperm.xlu0 %1175, %v1112
    %v1177 = vpop.permute.xlu0 %1176
    %1180 = vset.pattern.permute.xlu0 0
    %1181 = vperm.xlu0 %1180, %v1127
    %v1182 = vpop.permute.xlu0 %1181
    %v1184 = vmul.f32 %v1147, %v1128
    %v1185 = vmul.f32 %v1147, %v1129
    %v1186 = vmul.f32 %v1152, %v1130
    %v1187 = vmul.f32 %v1152, %v1131
    %v1188 = vmul.f32 %v1157, %v1132
    %v1189 = vmul.f32 %v1157, %v1133
    %v1190 = vmul.f32 %v1162, %v1134
    %v1191 = vmul.f32 %v1162, %v1135
    %v1192 = vmul.f32 %v1167, %v1136
    %v1193 = vmul.f32 %v1167, %v1137
    %v1194 = vmul.f32 %v1172, %v1138
    %v1195 = vmul.f32 %v1172, %v1139
    %v1196 = vmul.f32 %v1177, %v1140
    %v1197 = vmul.f32 %v1177, %v1141
    %v1198 = vmul.f32 %v1182, %v1142
    %v1199 = vmul.f32 %v1182, %v1143
    %1200 = vst [vmem:[#allocation8] sm:$0xff] %v1184
    %1201 = vst [vmem:[#allocation8 + $0x8] sm:$0xff] %v1185
    %1202 = vst [vmem:[#allocation8 + $0x10] sm:$0xff] %v1186
    %1203 = vst [vmem:[#allocation8 + $0x18] sm:$0xff] %v1187
    %1204 = vst [vmem:[#allocation8 + $0x20] sm:$0xff] %v1188
    %1205 = vst [vmem:[#allocation8 + $0x28] sm:$0xff] %v1189
    %1206 = vst [vmem:[#allocation8 + $0x30] sm:$0xff] %v1190
    %1207 = vst [vmem:[#allocation8 + $0x38] sm:$0xff] %v1191
    %1208 = vst [vmem:[#allocation8 + $0x40] sm:$0xff] %v1192
    %1209 = vst [vmem:[#allocation8 + $0x48] sm:$0xff] %v1193
    %1210 = vst [vmem:[#allocation8 + $0x50] sm:$0xff] %v1194
    %1211 = vst [vmem:[#allocation8 + $0x58] sm:$0xff] %v1195
    %1212 = vst [vmem:[#allocation8 + $0x60] sm:$0xff] %v1196
    %1213 = vst [vmem:[#allocation8 + $0x68] sm:$0xff] %v1197
    %1214 = vst [vmem:[#allocation8 + $0x70] sm:$0xff] %v1198
    %1215 = vst [vmem:[#allocation8 + $0x78] sm:$0xff] %v1199
    // Predicated region
    $region26: #{tpu_custom_call.1} parent=1 // pred_check
      _
    $region27: #{tpu_custom_call.1} parent=1 // pred_check_branch
      %1217 = sbr.rel (0) target = $region29
    $region28: #{tpu_custom_call.1} parent=1 // pred_region
      %1219 = vsyncadd [#allocation4], 0
      %s1220 = sshll.u32 [#allocation8], 4
      %s1221 = int_to_ptr.vmem [resolvable:$true] %s1220
      %s1222 = sshll.u32 %s3, 4
      %s1223 = int_to_ptr.hbm [resolvable:$true] %s1222
      %1228 = dma.vmem_to_hbm [thread:$0]  %s1221, 2048, %s1223, [#allocation4], 256, 256, 16
    $region29: #{tpu_custom_call.1} parent=1 // pred_fallthru
      _
    // Predicated region
    $region30: #{tpu_custom_call.1} parent=1 // pred_check
      _
    $region31: #{tpu_custom_call.1} parent=1 // pred_check_branch
      %1230 = sbr.rel (0) target = $region33
    $region32: #{tpu_custom_call.1} parent=1 // pred_region
      %1232 = dma.done [#allocation4], 2048
    $region33: #{tpu_custom_call.1} parent=1 // pred_fallthru
      _
    %1233 = vsyncpa [#allocation3], 1
    %1234 = vsyncpa [#allocation6], 1
    %1235 = vsyncpa [#allocation4], 1

</llo_original>
